<compile_context>
chip_gen: v7x
topology: tpu7x:2x2x1
jax: 0.10.0
libtpu: 0.0.40
codegen_flags: <defaults>
</compile_context>

<pallas_src>
import jax
import jax.numpy as jnp
from jax.experimental import pallas as pl
from jax.experimental.pallas import tpu as pltpu


_SQRT_2_OVER_PI = 0.7978845608028654


def _gelu(x):
    # tanh-approximate GELU: one EUP tanh + a few VALU ops.
    # TODO(synk): nn.GELU() default is exact erf; the tanh form deviates by up
    # to ~1e-3 abs (documented accuracy/perf trade-off).
    return 0.5 * x * (1.0 + jnp.tanh(_SQRT_2_OVER_PI * (x + 0.044715 * x * x * x)))


def _round_up(x, m):
    return ((x + m - 1) // m) * m


# ----------------------------------------------------------------------------
# Kernel 1: folded ValueEmbedding + mapping MLP + AdaptiveMaxPool1d(1) over V
# ----------------------------------------------------------------------------
def make_encode_kernel(v_real):
    def encode_kernel(x_ref, c1_ref, c2_ref, w2_ref, b2_ref, o_ref):
        # x_ref : (TILE_N, Vb) f32   rows in time-major (t, b) order
        # c1/c2 : (1, Hp) f32        folded affine: gelu-input = x*c1 + c2
        # w2    : (Hp, Hp) bf16      second mapping Linear (bf16 MXU operand)
        # b2    : (1, Hp) f32
        # o_ref : (TILE_N, Hp) bf16  max over variables of the mapping output
        tn, vb = x_ref.shape
        h = o_ref.shape[1]
        c1 = c1_ref[...].reshape(1, 1, h)
        c2 = c2_ref[...].reshape(1, 1, h)
        # Pre-activation for every (row, variable) is a pure broadcast (VPU):
        # the Linear(1,H) and the first Linear(H,H) were folded into c1/c2.
        pre = x_ref[...][:, :, None] * c1 + c2                  # (tn, vb, Hp)
        act = _gelu(pre).reshape(tn * vb, h)                    # free (vb % 8 == 0)
        # ONE bf16 MXU matmul over the whole slab for the second mapping Linear.
        m2 = jnp.dot(act.astype(jnp.bfloat16), w2_ref[...],
                     preferred_element_type=jnp.float32) + b2_ref[...]
        m2 = m2.reshape(tn, vb, h)
        if vb != v_real:
            # variables padded to a multiple of 8: exclude them from the max.
            var_ids = jax.lax.broadcasted_iota(jnp.int32, (tn, vb, h), 1)
            m2 = jnp.where(var_ids < v_real, m2, -jnp.inf)
        # AdaptiveMaxPool1d(1) over the variable axis.
        o_ref[...] = jnp.max(m2, axis=1).astype(o_ref.dtype)

    return encode_kernel


# ----------------------------------------------------------------------------
# Kernel 2: fused stacked LSTM (time loop kept in VMEM) + decoder MLP + mask
# ----------------------------------------------------------------------------
def make_lstm_decoder_kernel(n_layers, h_pad, seq_len, tile_b):
    bf16 = jnp.bfloat16
    rows = seq_len * tile_b

    def kernel(*refs):
        x_ref = refs[0]                                      # (L, TB, Hp) bf16
        lstm_refs = refs[1:1 + 3 * n_layers]                 # (wih, whh, b) per layer
        dw1_ref, db1_ref, dw2_ref, db2_ref, mask_ref = refs[1 + 3 * n_layers:
                                                            6 + 3 * n_layers]
        o_ref = refs[6 + 3 * n_layers]                       # (L, TB, Vp) f32
        seq_ref, zx_ref = refs[7 + 3 * n_layers:]            # (L,TB,Hp) bf16, (L,TB,4Hp) bf16

        for layer in range(n_layers):
            wih = lstm_refs[3 * layer][...]                  # (Hp, 4Hp) bf16 = W_ih^T
            whh = lstm_refs[3 * layer + 1][...]              # (Hp, 4Hp) bf16 = W_hh^T
            bias = lstm_refs[3 * layer + 2][...]             # (1, 4Hp) f32 = b_ih + b_hh

            # Hoisted input projection: ONE slab matmul per layer (all of
            # x @ W_ih + b computed before the sequential recurrence).
            xin = (x_ref[...] if layer == 0 else seq_ref[...]).reshape(rows, h_pad)
            zx = jnp.dot(xin, wih, preferred_element_type=jnp.float32) + bias
            # zx/seq are kept as bf16 VMEM slabs (halves scratch; z is re-summed
            # in f32 with the recurrent matmul below).
            zx_ref[...] = zx.reshape(seq_len, tile_b, 4 * h_pad).astype(zx_ref.dtype)

            def step(t, carry):
                h_prev, c_prev = carry                       # (TB, Hp) f32
                z = zx_ref[t].astype(jnp.float32) + jnp.dot(
                    h_prev.astype(bf16), whh, preferred_element_type=jnp.float32)
                # PyTorch gate order i, f, g, o; all slices are 128-lane aligned.
                i_g = jax.nn.sigmoid(z[:, 0:h_pad])
                f_g = jax.nn.sigmoid(z[:, h_pad:2 * h_pad])
                g_g = jnp.tanh(z[:, 2 * h_pad:3 * h_pad])
                o_g = jax.nn.sigmoid(z[:, 3 * h_pad:4 * h_pad])
                c_t = f_g * c_prev + i_g * g_g
                h_t = o_g * jnp.tanh(c_t)
                seq_ref[t] = h_t.astype(seq_ref.dtype)       # time-major layer output
                return (h_t, c_t)

            init = (jnp.zeros((tile_b, h_pad), jnp.float32),
                    jnp.zeros((tile_b, h_pad), jnp.float32))
            # Unroll so the scheduler can overlap step t's gate/EUP work with
            # step t+1's independent loads.
            # TODO(synk): for very long L, keep W_hh staged via
            # pltpu.matmul_push_rhs/acc_lhs/pop instead of re-issuing it.
            jax.lax.fori_loop(0, seq_len, step, init,
                              unroll=True if seq_len <= 16 else 2)
            # Inter-layer LSTM dropout is identity in eval mode.

        # Fused decoder, also as slab matmuls over (L*TB, ·):
        # Linear(H, H/2) -> GELU -> Linear(H/2, V), then mask.
        hs = seq_ref[...].reshape(rows, h_pad)                          # bf16
        mid = _gelu(jnp.dot(hs, dw1_ref[...],
                            preferred_element_type=jnp.float32) + db1_ref[...])
        y = jnp.dot(mid.astype(bf16), dw2_ref[...],
                    preferred_element_type=jnp.float32) + db2_ref[...]
        o_ref[...] = y.reshape(seq_len, tile_b, -1) * mask_ref[...]     # lane-dense store

    return kernel


# ----------------------------------------------------------------------------
# Wrapper: parameter folding + lane padding + pallas_calls + output unpad
# ----------------------------------------------------------------------------
def _pad2(w, r, c):
    return jnp.pad(w, ((0, r - w.shape[0]), (0, c - w.shape[1])))


def _pad_last(bvec, c):
    return jnp.pad(bvec, ((0, 0), (0, c - bvec.shape[1])))


def _pad_gates_w(w, h, h_pad):
    """(Hin, 4H) gate-blocked weight -> (Hin_pad, 4*H_pad), zeros elsewhere."""
    in_dim = w.shape[0]
    in_pad = _round_up(in_dim, 128)
    out = jnp.zeros((in_pad, 4 * h_pad), w.dtype)
    for g in range(4):
        out = out.at[:in_dim, g * h_pad:g * h_pad + h].set(w[:, g * h:(g + 1) * h])
    return out


def _pad_gates_b(bvec, h, h_pad):
    out = jnp.zeros((1, 4 * h_pad), bvec.dtype)
    for g in range(4):
        out = out.at[:, g * h_pad:g * h_pad + h].set(bvec[:, g * h:(g + 1) * h])
    return out


def imputer_forward(params, x, mask):
    b, l, v = x.shape
    h = params["map_w2"].shape[0]
    h2 = params["dec_w1"].shape[1]
    n_layers = params["n_layers"]
    f32, bf16 = jnp.float32, jnp.bfloat16

    h_pad = _round_up(h, 128)
    h2_pad = _round_up(h2, 128)
    v_pad = _round_up(v, 128)
    v_blk = _round_up(v, 8)

    x = x.astype(f32)
    mask = mask.astype(f32)

    # ---- VMEM budget (v7x: 64 MiB/TC, v5e/v6e: 128 MiB) ---------------------
    try:
        vmem_cap = int(getattr(pltpu.get_tpu_info(), "vmem_capacity_bytes",
                               64 * 1024 * 1024))
    except Exception:
        vmem_cap = 64 * 1024 * 1024
    vmem_limit = max(32 * 1024 * 1024,
                     min((vmem_cap * 3) // 4, 96 * 1024 * 1024))
    budget = (vmem_limit * 4) // 5

    # ---- fold ValueEmbedding (Linear(1,H)) with the first mapping Linear ----
    #   (x*ew + eb) @ W1 + b1  ==  x * (ew@W1) + (eb@W1 + b1)
    c1 = jnp.dot(params["emb_w"], params["map_w1"])                      # (1, H)
    c2 = jnp.dot(params["emb_b"], params["map_w1"]) + params["map_b1"]   # (1, H)
    c1 = _pad_last(c1, h_pad)
    c2 = _pad_last(c2, h_pad)
    w2 = _pad2(params["map_w2"], h_pad, h_pad).astype(bf16)
    b2 = _pad_last(params["map_b2"], h_pad)

    # ---- batch tiling (multiple of 8/16 so flattened views are layout-free) -
    tile_b = _round_up(b, 8) if b <= 8 else min(_round_up(b, 16), 128)

    def lstm_vmem_bytes(tb):
        blocks = 2 * l * tb * (h_pad * 2 + v_pad * 4 + v_pad * 4)   # x/mask/out (dbuf)
        scratch = l * tb * (h_pad * 2 + 4 * h_pad * 2)              # seq + zx (bf16)
        inter = l * tb * (4 * h_pad + h2_pad + v_pad) * 4           # f32 matmul results
        weights = 2 * (n_layers * (2 * h_pad * 4 * h_pad * 2 + 4 * h_pad * 4)
                       + h_pad * h2_pad * 2 + h2_pad * 4
                       + h2_pad * v_pad * 2 + v_pad * 4)
        return blocks + scratch + inter + weights

    while tile_b > 16 and lstm_vmem_bytes(tile_b) > budget:
        tile_b -= 16
    # TODO(synk): for very large L*H on v7x (64 MiB VMEM) chunk the hoisted
    # input projection over L instead of only shrinking tile_b.
    # TODO(synk): on v7x pick tile_b <= ceil(B/2) for large B so the "parallel"
    # batch grid has >= 2 steps and both TensorCores are used.
    b_pad = tile_b * pl.cdiv(b, tile_b)
    grid_b = b_pad // tile_b

    # ---- encode: time-major rows N = L * B_pad ------------------------------
    x_t = jnp.transpose(x, (1, 0, 2))                        # (L, B, V): small transpose
    x_t = jnp.pad(x_t, ((0, 0), (0, b_pad - b), (0, v_blk - v)))
    n_rows = l * b_pad
    x2 = x_t.reshape(n_rows, v_blk)                          # metadata-only reshape

    tile_n = 1024
    while tile_n > 16 and tile_n * v_blk * h_pad * 16 > budget:
        tile_n //= 2
    tile_n = min(tile_n, n_rows)
    grid_n = pl.cdiv(n_rows, tile_n)

    enc_cost = pl.CostEstimate(
        flops=2 * n_rows * v_blk * h_pad * h_pad + 10 * n_rows * v_blk * h_pad,
        transcendentals=n_rows * v_blk * h_pad,
        bytes_accessed=4 * n_rows * v_blk + 2 * n_rows * h_pad
                       + 2 * h_pad * h_pad + 16 * h_pad)
    pooled = pl.pallas_call(
        make_encode_kernel(v),
        out_shape=jax.ShapeDtypeStruct((n_rows, h_pad), bf16),
        grid=(grid_n,),
        in_specs=[
            pl.BlockSpec((tile_n, v_blk), lambda i: (i, 0)),
            pl.BlockSpec((1, h_pad), lambda i: (0, 0)),
            pl.BlockSpec((1, h_pad), lambda i: (0, 0)),
            pl.BlockSpec((h_pad, h_pad), lambda i: (0, 0)),
            pl.BlockSpec((1, h_pad), lambda i: (0, 0)),
        ],
        out_specs=pl.BlockSpec((tile_n, h_pad), lambda i: (i, 0)),
        compiler_params=pltpu.CompilerParams(
            dimension_semantics=("parallel",),
            vmem_limit_bytes=vmem_limit),
        cost_estimate=enc_cost,
    )(x2, c1, c2, w2, b2)

    # ---- fused stacked LSTM + decoder + mask, gridded over batch blocks -----
    seq = pooled.reshape(l, b_pad, h_pad)                    # time-major, metadata-only
    mask_t = jnp.pad(jnp.transpose(mask, (1, 0, 2)),
                     ((0, 0), (0, b_pad - b), (0, v_pad - v)))

    lstm_in = [seq]
    lstm_specs = [pl.BlockSpec((l, tile_b, h_pad), lambda i: (0, i, 0))]
    for layer in range(n_layers):
        wih = _pad_gates_w(params[f"lstm_wih_{layer}"], h, h_pad).astype(bf16)
        whh = _pad_gates_w(params[f"lstm_whh_{layer}"], h, h_pad).astype(bf16)
        bg = _pad_gates_b(params[f"lstm_b_{layer}"], h, h_pad)
        for arr in (wih, whh, bg):
            lstm_in.append(arr)
            lstm_specs.append(pl.BlockSpec(arr.shape, lambda i: (0, 0)))
    dw1 = _pad2(params["dec_w1"], h_pad, h2_pad).astype(bf16)
    db1 = _pad_last(params["dec_b1"], h2_pad)
    dw2 = _pad2(params["dec_w2"], h2_pad, v_pad).astype(bf16)
    db2 = _pad_last(params["dec_b2"], v_pad)
    for arr in (dw1, db1, dw2, db2):
        lstm_in.append(arr)
        lstm_specs.append(pl.BlockSpec(arr.shape, lambda i: (0, 0)))
    lstm_in.append(mask_t)
    lstm_specs.append(pl.BlockSpec((l, tile_b, v_pad), lambda i: (0, i, 0)))

    lstm_cost = pl.CostEstimate(
        flops=2 * b_pad * l * (n_layers * 2 * h_pad * 4 * h_pad
                               + h_pad * h2_pad + h2_pad * v_pad),
        transcendentals=b_pad * l * (n_layers * 5 * h_pad + h2_pad),
        bytes_accessed=2 * b_pad * l * h_pad + 8 * b_pad * l * v_pad
                       + 2 * n_layers * (2 * h_pad * 4 * h_pad)
                       + 2 * (h_pad * h2_pad + h2_pad * v_pad))
    out_t = pl.pallas_call(
        make_lstm_decoder_kernel(n_layers, h_pad, l, tile_b),
        out_shape=jax.ShapeDtypeStruct((l, b_pad, v_pad), f32),
        grid=(grid_b,),
        in_specs=lstm_specs,
        out_specs=pl.BlockSpec((l, tile_b, v_pad), lambda i: (0, i, 0)),
        scratch_shapes=[pltpu.VMEM((l, tile_b, h_pad), bf16),
                        pltpu.VMEM((l, tile_b, 4 * h_pad), bf16)],
        compiler_params=pltpu.CompilerParams(
            dimension_semantics=("parallel",),
            vmem_limit_bytes=vmem_limit),
        cost_estimate=lstm_cost,
    )(*lstm_in)

    # Un-pad: (L, B_pad, V_pad) -> (B, L, V); transpose of a small array in XLA.
    return jnp.transpose(out_t, (1, 0, 2))[:b, :, :v]


# ----------------------------------------------------------------------------
# Deterministic parameter initialization (shapes from Imputer.__init__);
# Linear weights stored transposed as (in, out) so kernels compute x @ W + b.
# ----------------------------------------------------------------------------
def init_params(key, varible_num, hidden_dim, n_layers):
    h, v, h2 = hidden_dim, varible_num, hidden_dim // 2
    keys = jax.random.split(key, 12 + 4 * n_layers)

    def u(k, shape, fan_in):
        bound = 1.0 / (fan_in ** 0.5)
        return jax.random.uniform(k, shape, jnp.float32, -bound, bound)

    p = {
        "n_layers": n_layers,
        # ValueEmbedding: nn.Linear(1, H)
        "emb_w": u(keys[0], (1, h), 1.0),
        "emb_b": u(keys[1], (1, h), 1.0),
        # mapping: Linear(H,H) -> GELU -> Dropout -> Linear(H,H)
        "map_w1": u(keys[2], (h, h), h),
        "map_b1": u(keys[3], (1, h), h),
        "map_w2": u(keys[4], (h, h), h),
        "map_b2": u(keys[5], (1, h), h),
        # decoder: Linear(H, H//2) -> GELU -> Dropout -> Linear(H//2, V)
        "dec_w1": u(keys[6], (h, h2), h),
        "dec_b1": u(keys[7], (1, h2), h),
        "dec_w2": u(keys[8], (h2, v), h2),
        "dec_b2": u(keys[9], (1, v), h2),
    }
    # LSTM(H, H, n_layers, batch_first, unidirectional); PyTorch gate order ifgo.
    kidx = 12
    for layer in range(n_layers):
        hin = h  # D=1, so every layer's input size is H
        p[f"lstm_wih_{layer}"] = u(keys[kidx + 0], (hin, 4 * h), h)
        p[f"lstm_whh_{layer}"] = u(keys[kidx + 1], (h, 4 * h), h)
        b_ih = u(keys[kidx + 2], (1, 4 * h), h)
        b_hh = u(keys[kidx + 3], (1, 4 * h), h)
        p[f"lstm_b_{layer}"] = b_ih + b_hh
        kidx += 4
    return p


if __name__ == "__main__":
    B, L = 2, 8
    VARIBLE_NUM, HIDDEN, N_LAYERS = 8, 32, 2

    key = jax.random.PRNGKey(0)
    k_par, k_x, k_m = jax.random.split(key, 3)
    params = init_params(k_par, VARIBLE_NUM, HIDDEN, N_LAYERS)

    x = jax.random.normal(k_x, (B, L, VARIBLE_NUM), jnp.float32)
    mask = (jax.random.uniform(k_m, (B, L, VARIBLE_NUM)) > 0.3).astype(jnp.float32)

    out = imputer_forward(params, x, mask)
    jax.block_until_ready(out)
    assert out.shape == (B, L, VARIBLE_NUM) and out.dtype == jnp.float32
    print("KERNEL_OK")
</pallas_src>

<mosaic_0001>
module attributes {stable_mosaic.version = 11 : i64} {
  func.func @encode_kernel(%arg0: i32, %arg1: memref<64x8xf32, #tpu.memory_space<vmem>>, %arg2: memref<1x128xf32, #tpu.memory_space<vmem>>, %arg3: memref<1x128xf32, #tpu.memory_space<vmem>>, %arg4: memref<128x128xbf16, #tpu.memory_space<vmem>>, %arg5: memref<1x128xf32, #tpu.memory_space<vmem>>, %arg6: memref<64x128xbf16, #tpu.memory_space<vmem>>) attributes {dimension_semantics = [#tpu.dimension_semantics<parallel>], iteration_bounds = array<i64: 1>, scalar_prefetch = 0 : i64, scratch_operands = 0 : i64, tpu.core_type = #tpu.core_type<tc>, window_params = [{transform_indices = @transform_0, window_bounds = array<i64: 64, 8>}, {pipeline_mode = #tpu.pipeline_mode<synchronous>, transform_indices = @transform_1, window_bounds = array<i64: 1, 128>}, {pipeline_mode = #tpu.pipeline_mode<synchronous>, transform_indices = @transform_2, window_bounds = array<i64: 1, 128>}, {pipeline_mode = #tpu.pipeline_mode<synchronous>, transform_indices = @transform_3, window_bounds = array<i64: 128, 128>}, {pipeline_mode = #tpu.pipeline_mode<synchronous>, transform_indices = @transform_4, window_bounds = array<i64: 1, 128>}, {transform_indices = @transform_5, window_bounds = array<i64: 64, 128>}]} {
    %c0 = arith.constant 0 : index
    %c0_0 = arith.constant 0 : index
    %0 = vector.load %arg2[%c0, %c0_0] : memref<1x128xf32, #tpu.memory_space<vmem>>, vector<1x128xf32>
    %1 = vector.shape_cast %0 : vector<1x128xf32> to vector<1x1x128xf32>
    %c0_1 = arith.constant 0 : index
    %c0_2 = arith.constant 0 : index
    %2 = vector.load %arg3[%c0_1, %c0_2] : memref<1x128xf32, #tpu.memory_space<vmem>>, vector<1x128xf32>
    %3 = vector.shape_cast %2 : vector<1x128xf32> to vector<1x1x128xf32>
    %c0_3 = arith.constant 0 : index
    %c0_4 = arith.constant 0 : index
    %4 = vector.load %arg1[%c0_3, %c0_4] : memref<64x8xf32, #tpu.memory_space<vmem>>, vector<64x8xf32>
    %5 = vector.shape_cast %4 : vector<64x8xf32> to vector<64x8x1xf32>
    %6 = vector.broadcast %5 : vector<64x8x1xf32> to vector<64x8x128xf32>
    %7 = vector.broadcast %1 : vector<1x1x128xf32> to vector<64x8x128xf32>
    %8 = arith.mulf %6, %7 : vector<64x8x128xf32>
    %9 = vector.broadcast %3 : vector<1x1x128xf32> to vector<64x8x128xf32>
    %10 = arith.addf %8, %9 : vector<64x8x128xf32>
    %cst = arith.constant 5.000000e-01 : f32
    %11 = vector.broadcast %cst : f32 to vector<64x8x128xf32>
    %12 = arith.mulf %11, %10 : vector<64x8x128xf32>
    %cst_5 = arith.constant 4.471500e-02 : f32
    %13 = vector.broadcast %cst_5 : f32 to vector<64x8x128xf32>
    %14 = arith.mulf %13, %10 : vector<64x8x128xf32>
    %15 = arith.mulf %14, %10 : vector<64x8x128xf32>
    %16 = arith.mulf %15, %10 : vector<64x8x128xf32>
    %17 = arith.addf %10, %16 : vector<64x8x128xf32>
    %cst_6 = arith.constant 0.797884583 : f32
    %18 = vector.broadcast %cst_6 : f32 to vector<64x8x128xf32>
    %19 = arith.mulf %18, %17 : vector<64x8x128xf32>
    %20 = math.tanh %19 : vector<64x8x128xf32>
    %cst_7 = arith.constant 1.000000e+00 : f32
    %21 = vector.broadcast %cst_7 : f32 to vector<64x8x128xf32>
    %22 = arith.addf %21, %20 : vector<64x8x128xf32>
    %23 = arith.mulf %12, %22 : vector<64x8x128xf32>
    %24 = vector.shape_cast %23 : vector<64x8x128xf32> to vector<512x128xf32>
    %25 = arith.truncf %24 : vector<512x128xf32> to vector<512x128xbf16>
    %c0_8 = arith.constant 0 : index
    %c0_9 = arith.constant 0 : index
    %26 = vector.load %arg4[%c0_8, %c0_9] : memref<128x128xbf16, #tpu.memory_space<vmem>>, vector<128x128xbf16>
    %cst_10 = arith.constant dense<0.000000e+00> : vector<512x128xf32>
    %27 = tpu.matmul %25, %26, %cst_10 {dimension_numbers = #tpu.dot_dimension_numbers<[1], [0], [0], [1], [0, 0, 1, 1], [], []>} : vector<512x128xbf16>, vector<128x128xbf16>, vector<512x128xf32> -> vector<512x128xf32>
    %c0_11 = arith.constant 0 : index
    %c0_12 = arith.constant 0 : index
    %28 = vector.load %arg5[%c0_11, %c0_12] : memref<1x128xf32, #tpu.memory_space<vmem>>, vector<1x128xf32>
    %29 = vector.broadcast %28 : vector<1x128xf32> to vector<512x128xf32>
    %30 = arith.addf %27, %29 : vector<512x128xf32>
    %31 = vector.shape_cast %30 : vector<512x128xf32> to vector<64x8x128xf32>
    %cst_13 = arith.constant dense<0xFF800000> : vector<64x128xf32>
    %32 = vector.multi_reduction <maximumf>, %31, %cst_13 [1] : vector<64x8x128xf32> to vector<64x128xf32>
    %33 = arith.truncf %32 : vector<64x128xf32> to vector<64x128xbf16>
    %c0_14 = arith.constant 0 : index
    %c0_15 = arith.constant 0 : index
    %34 = vector.load %arg6[%c0_14, %c0_15] : memref<64x128xbf16, #tpu.memory_space<vmem>>, vector<64x128xbf16>
    tpu.vector_store %arg6[%c0_14, %c0_15], %33 {strides = array<i32>} : memref<64x128xbf16, #tpu.memory_space<vmem>>, vector<64x128xbf16>,
    return
  }
  func.func @transform_0(%arg0: i32) -> (i32, i32) {
    %c0_i32 = arith.constant 0 : i32
    %c0_i32_0 = arith.constant 0 : i32
    return %arg0, %c0_i32 : i32, i32
  }
  func.func @transform_1(%arg0: i32) -> (i32, i32) {
    %c0_i32 = arith.constant 0 : i32
    %c0_i32_0 = arith.constant 0 : i32
    %c0_i32_1 = arith.constant 0 : i32
    return %c0_i32, %c0_i32_0 : i32, i32
  }
  func.func @transform_2(%arg0: i32) -> (i32, i32) {
    %c0_i32 = arith.constant 0 : i32
    %c0_i32_0 = arith.constant 0 : i32
    %c0_i32_1 = arith.constant 0 : i32
    return %c0_i32, %c0_i32_0 : i32, i32
  }
  func.func @transform_3(%arg0: i32) -> (i32, i32) {
    %c0_i32 = arith.constant 0 : i32
    %c0_i32_0 = arith.constant 0 : i32
    %c0_i32_1 = arith.constant 0 : i32
    return %c0_i32, %c0_i32_0 : i32, i32
  }
  func.func @transform_4(%arg0: i32) -> (i32, i32) {
    %c0_i32 = arith.constant 0 : i32
    %c0_i32_0 = arith.constant 0 : i32
    %c0_i32_1 = arith.constant 0 : i32
    return %c0_i32, %c0_i32_0 : i32, i32
  }
  func.func @transform_5(%arg0: i32) -> (i32, i32) {
    %c0_i32 = arith.constant 0 : i32
    %c0_i32_0 = arith.constant 0 : i32
    return %arg0, %c0_i32 : i32, i32
  }
}

</mosaic_0001>

<llo_original>
// kernel: tpu_custom_call.1
$region0: #{tpu_custom_call.1}
  #allocation0 [shape = 'u32[]', space=smem, size = 0x4, offset = 0x4, fixed_abs, tag = 'smem constant byte address 0x4 - core index']
  #allocation1 [shape = 'u32[144,128]{1,0:T(1,128)}', space=vmem, size = 0x12000, scoped, tag = 'internal scratch']
  %s0 = inlined_call_operand.vmem [shape: f32[64,8], index: 0, kind: input, shape index: {}]
  %s1 = inlined_call_operand.vmem [shape: f32[1,128], index: 1, kind: input, shape index: {}]
  %s2 = inlined_call_operand.vmem [shape: f32[1,128], index: 2, kind: input, shape index: {}]
  %s3 = inlined_call_operand.vmem [shape: bf16[128,128], index: 3, kind: input, shape index: {}]
  %s4 = inlined_call_operand.vmem [shape: f32[1,128], index: 4, kind: input, shape index: {}]
  %s5 = inlined_call_operand.hbm [shape: bf16[64,128], index: 5, kind: output, shape index: {}]
  %s6 = sld [smem:[#allocation0]]
  $region30: #{tpu_custom_call.1} parent=0
    _
  %s8 = ssub.s32 1, %s6
  %s9 = scalar_select 0, %s8, %s6
  $region1: #{tpu_custom_call.1} parent=0
    #allocation2 [shape = 'u8[16384]{0}', space=vmem, size = 0x4000, scoped, tag = 'output window, operand 0, single buffered']
    #allocation3 [shape = 's32[1]{0}', space=sflag, size = 0x4, scoped, tag = 'scoped memory for tpu_custom_call.1']
    %10 = vsyncpa [#allocation3], 0
    // Predicated region
    $region2: #{tpu_custom_call.1} parent=1 // pred_check
      _
    $region3: #{tpu_custom_call.1} parent=1 // pred_check_branch
      %12 = sbr.rel (0) target = $region5
    $region4: #{tpu_custom_call.1} parent=1 // pred_region
      _
    $region5: #{tpu_custom_call.1} parent=1 // pred_fallthru
      _
    // Predicated region
    $region6: #{tpu_custom_call.1} parent=1 // pred_check
      _
    $region7: #{tpu_custom_call.1} parent=1 // pred_check_branch
      %14 = sbr.rel (0) target = $region9
    $region8: #{tpu_custom_call.1} parent=1 // pred_region
      _
    $region9: #{tpu_custom_call.1} parent=1 // pred_fallthru
      _
    // Predicated region
    $region10: #{tpu_custom_call.1} parent=1 // pred_check
      _
    $region11: #{tpu_custom_call.1} parent=1 // pred_check_branch
      %16 = sbr.rel (0) target = $region13
    $region12: #{tpu_custom_call.1} parent=1 // pred_region
      _
    $region13: #{tpu_custom_call.1} parent=1 // pred_fallthru
      _
    // Predicated region
    $region14: #{tpu_custom_call.1} parent=1 // pred_check
      _
    $region15: #{tpu_custom_call.1} parent=1 // pred_check_branch
      %18 = sbr.rel (0) target = $region17
    $region16: #{tpu_custom_call.1} parent=1 // pred_region
      _
    $region17: #{tpu_custom_call.1} parent=1 // pred_fallthru
      _
    // Predicated region
    $region18: #{tpu_custom_call.1} parent=1 // pred_check
      _
    $region19: #{tpu_custom_call.1} parent=1 // pred_check_branch
      %20 = sbr.rel (0) target = $region21
    $region20: #{tpu_custom_call.1} parent=1 // pred_region
      _
    $region21: #{tpu_custom_call.1} parent=1 // pred_fallthru
      _
    %v22 = vld [vmem:[%s1] sm:$0x1]
    %v23 = vld [vmem:[%s2] sm:$0x1]
    %v24 = vld [vmem:[%s0] sm:$0xff]
    %v25 = vld [vmem:[%s0 + $0x8] sm:$0xff]
    %v26 = vld [vmem:[%s0 + $0x10] sm:$0xff]
    %v27 = vld [vmem:[%s0 + $0x18] sm:$0xff]
    %v28 = vld [vmem:[%s0 + $0x20] sm:$0xff]
    %v29 = vld [vmem:[%s0 + $0x28] sm:$0xff]
    %v30 = vld [vmem:[%s0 + $0x30] sm:$0xff]
    %v31 = vld [vmem:[%s0 + $0x38] sm:$0xff]
    %v32 = vlaneseq
    %v33 = vshrl.u32 %v32, 7
    %v34 = vsub.s32 0, %v33
    %v35 = vrot.slane %v24, %v34
    %37 = vbcast.lane.b32.xlu0 %v35, 256
    %v38 = vpop.permute.xlu0 %37
    %v39 = vlaneseq
    %v40 = vshrl.u32 %v39, 7
    %v41 = vsub.s32 1, %v40
    %v42 = vrot.slane %v24, %v41
    %44 = vbcast.lane.b32.xlu0 %v42, 256
    %v45 = vpop.permute.xlu0 %44
    %v46 = vlaneseq
    %v47 = vshrl.u32 %v46, 7
    %v48 = vsub.s32 2, %v47
    %v49 = vrot.slane %v24, %v48
    %51 = vbcast.lane.b32.xlu0 %v49, 256
    %v52 = vpop.permute.xlu0 %51
    %v53 = vlaneseq
    %v54 = vshrl.u32 %v53, 7
    %v55 = vsub.s32 3, %v54
    %v56 = vrot.slane %v24, %v55
    %58 = vbcast.lane.b32.xlu0 %v56, 256
    %v59 = vpop.permute.xlu0 %58
    %v60 = vlaneseq
    %v61 = vshrl.u32 %v60, 7
    %v62 = vsub.s32 4, %v61
    %v63 = vrot.slane %v24, %v62
    %65 = vbcast.lane.b32.xlu0 %v63, 256
    %v66 = vpop.permute.xlu0 %65
    %v67 = vlaneseq
    %v68 = vshrl.u32 %v67, 7
    %v69 = vsub.s32 5, %v68
    %v70 = vrot.slane %v24, %v69
    %72 = vbcast.lane.b32.xlu0 %v70, 256
    %v73 = vpop.permute.xlu0 %72
    %v74 = vlaneseq
    %v75 = vshrl.u32 %v74, 7
    %v76 = vsub.s32 6, %v75
    %v77 = vrot.slane %v24, %v76
    %79 = vbcast.lane.b32.xlu0 %v77, 256
    %v80 = vpop.permute.xlu0 %79
    %v81 = vlaneseq
    %v82 = vshrl.u32 %v81, 7
    %v83 = vsub.s32 7, %v82
    %v84 = vrot.slane %v24, %v83
    %86 = vbcast.lane.b32.xlu0 %v84, 256
    %v87 = vpop.permute.xlu0 %86
    %v88 = vlaneseq
    %v89 = vshrl.u32 %v88, 7
    %v90 = vsub.s32 0, %v89
    %v91 = vrot.slane %v25, %v90
    %93 = vbcast.lane.b32.xlu0 %v91, 256
    %v94 = vpop.permute.xlu0 %93
    %v95 = vlaneseq
    %v96 = vshrl.u32 %v95, 7
    %v97 = vsub.s32 1, %v96
    %v98 = vrot.slane %v25, %v97
    %100 = vbcast.lane.b32.xlu0 %v98, 256
    %v101 = vpop.permute.xlu0 %100
    %v102 = vlaneseq
    %v103 = vshrl.u32 %v102, 7
    %v104 = vsub.s32 2, %v103
    %v105 = vrot.slane %v25, %v104
    %107 = vbcast.lane.b32.xlu0 %v105, 256
    %v108 = vpop.permute.xlu0 %107
    %v109 = vlaneseq
    %v110 = vshrl.u32 %v109, 7
    %v111 = vsub.s32 3, %v110
    %v112 = vrot.slane %v25, %v111
    %114 = vbcast.lane.b32.xlu0 %v112, 256
    %v115 = vpop.permute.xlu0 %114
    %v116 = vlaneseq
    %v117 = vshrl.u32 %v116, 7
    %v118 = vsub.s32 4, %v117
    %v119 = vrot.slane %v25, %v118
    %121 = vbcast.lane.b32.xlu0 %v119, 256
    %v122 = vpop.permute.xlu0 %121
    %v123 = vlaneseq
    %v124 = vshrl.u32 %v123, 7
    %v125 = vsub.s32 5, %v124
    %v126 = vrot.slane %v25, %v125
    %128 = vbcast.lane.b32.xlu0 %v126, 256
    %v129 = vpop.permute.xlu0 %128
    %v130 = vlaneseq
    %v131 = vshrl.u32 %v130, 7
    %v132 = vsub.s32 6, %v131
    %v133 = vrot.slane %v25, %v132
    %135 = vbcast.lane.b32.xlu0 %v133, 256
    %v136 = vpop.permute.xlu0 %135
    %v137 = vlaneseq
    %v138 = vshrl.u32 %v137, 7
    %v139 = vsub.s32 7, %v138
    %v140 = vrot.slane %v25, %v139
    %142 = vbcast.lane.b32.xlu0 %v140, 256
    %v143 = vpop.permute.xlu0 %142
    %v144 = vlaneseq
    %v145 = vshrl.u32 %v144, 7
    %v146 = vsub.s32 0, %v145
    %v147 = vrot.slane %v26, %v146
    %149 = vbcast.lane.b32.xlu0 %v147, 256
    %v150 = vpop.permute.xlu0 %149
    %v151 = vlaneseq
    %v152 = vshrl.u32 %v151, 7
    %v153 = vsub.s32 1, %v152
    %v154 = vrot.slane %v26, %v153
    %156 = vbcast.lane.b32.xlu0 %v154, 256
    %v157 = vpop.permute.xlu0 %156
    %v158 = vlaneseq
    %v159 = vshrl.u32 %v158, 7
    %v160 = vsub.s32 2, %v159
    %v161 = vrot.slane %v26, %v160
    %163 = vbcast.lane.b32.xlu0 %v161, 256
    %v164 = vpop.permute.xlu0 %163
    %v165 = vlaneseq
    %v166 = vshrl.u32 %v165, 7
    %v167 = vsub.s32 3, %v166
    %v168 = vrot.slane %v26, %v167
    %170 = vbcast.lane.b32.xlu0 %v168, 256
    %v171 = vpop.permute.xlu0 %170
    %v172 = vlaneseq
    %v173 = vshrl.u32 %v172, 7
    %v174 = vsub.s32 4, %v173
    %v175 = vrot.slane %v26, %v174
    %177 = vbcast.lane.b32.xlu0 %v175, 256
    %v178 = vpop.permute.xlu0 %177
    %v179 = vlaneseq
    %v180 = vshrl.u32 %v179, 7
    %v181 = vsub.s32 5, %v180
    %v182 = vrot.slane %v26, %v181
    %184 = vbcast.lane.b32.xlu0 %v182, 256
    %v185 = vpop.permute.xlu0 %184
    %v186 = vlaneseq
    %v187 = vshrl.u32 %v186, 7
    %v188 = vsub.s32 6, %v187
    %v189 = vrot.slane %v26, %v188
    %191 = vbcast.lane.b32.xlu0 %v189, 256
    %v192 = vpop.permute.xlu0 %191
    %v193 = vlaneseq
    %v194 = vshrl.u32 %v193, 7
    %v195 = vsub.s32 7, %v194
    %v196 = vrot.slane %v26, %v195
    %198 = vbcast.lane.b32.xlu0 %v196, 256
    %v199 = vpop.permute.xlu0 %198
    %v200 = vlaneseq
    %v201 = vshrl.u32 %v200, 7
    %v202 = vsub.s32 0, %v201
    %v203 = vrot.slane %v27, %v202
    %205 = vbcast.lane.b32.xlu0 %v203, 256
    %v206 = vpop.permute.xlu0 %205
    %v207 = vlaneseq
    %v208 = vshrl.u32 %v207, 7
    %v209 = vsub.s32 1, %v208
    %v210 = vrot.slane %v27, %v209
    %212 = vbcast.lane.b32.xlu0 %v210, 256
    %v213 = vpop.permute.xlu0 %212
    %v214 = vlaneseq
    %v215 = vshrl.u32 %v214, 7
    %v216 = vsub.s32 2, %v215
    %v217 = vrot.slane %v27, %v216
    %219 = vbcast.lane.b32.xlu0 %v217, 256
    %v220 = vpop.permute.xlu0 %219
    %v221 = vlaneseq
    %v222 = vshrl.u32 %v221, 7
    %v223 = vsub.s32 3, %v222
    %v224 = vrot.slane %v27, %v223
    %226 = vbcast.lane.b32.xlu0 %v224, 256
    %v227 = vpop.permute.xlu0 %226
    %v228 = vlaneseq
    %v229 = vshrl.u32 %v228, 7
    %v230 = vsub.s32 4, %v229
    %v231 = vrot.slane %v27, %v230
    %233 = vbcast.lane.b32.xlu0 %v231, 256
    %v234 = vpop.permute.xlu0 %233
    %v235 = vlaneseq
    %v236 = vshrl.u32 %v235, 7
    %v237 = vsub.s32 5, %v236
    %v238 = vrot.slane %v27, %v237
    %240 = vbcast.lane.b32.xlu0 %v238, 256
    %v241 = vpop.permute.xlu0 %240
    %v242 = vlaneseq
    %v243 = vshrl.u32 %v242, 7
    %v244 = vsub.s32 6, %v243
    %v245 = vrot.slane %v27, %v244
    %247 = vbcast.lane.b32.xlu0 %v245, 256
    %v248 = vpop.permute.xlu0 %247
    %v249 = vlaneseq
    %v250 = vshrl.u32 %v249, 7
    %v251 = vsub.s32 7, %v250
    %v252 = vrot.slane %v27, %v251
    %254 = vbcast.lane.b32.xlu0 %v252, 256
    %v255 = vpop.permute.xlu0 %254
    %v256 = vlaneseq
    %v257 = vshrl.u32 %v256, 7
    %v258 = vsub.s32 0, %v257
    %v259 = vrot.slane %v28, %v258
    %261 = vbcast.lane.b32.xlu0 %v259, 256
    %v262 = vpop.permute.xlu0 %261
    %v263 = vlaneseq
    %v264 = vshrl.u32 %v263, 7
    %v265 = vsub.s32 1, %v264
    %v266 = vrot.slane %v28, %v265
    %268 = vbcast.lane.b32.xlu0 %v266, 256
    %v269 = vpop.permute.xlu0 %268
    %v270 = vlaneseq
    %v271 = vshrl.u32 %v270, 7
    %v272 = vsub.s32 2, %v271
    %v273 = vrot.slane %v28, %v272
    %275 = vbcast.lane.b32.xlu0 %v273, 256
    %v276 = vpop.permute.xlu0 %275
    %v277 = vlaneseq
    %v278 = vshrl.u32 %v277, 7
    %v279 = vsub.s32 3, %v278
    %v280 = vrot.slane %v28, %v279
    %282 = vbcast.lane.b32.xlu0 %v280, 256
    %v283 = vpop.permute.xlu0 %282
    %v284 = vlaneseq
    %v285 = vshrl.u32 %v284, 7
    %v286 = vsub.s32 4, %v285
    %v287 = vrot.slane %v28, %v286
    %289 = vbcast.lane.b32.xlu0 %v287, 256
    %v290 = vpop.permute.xlu0 %289
    %v291 = vlaneseq
    %v292 = vshrl.u32 %v291, 7
    %v293 = vsub.s32 5, %v292
    %v294 = vrot.slane %v28, %v293
    %296 = vbcast.lane.b32.xlu0 %v294, 256
    %v297 = vpop.permute.xlu0 %296
    %v298 = vlaneseq
    %v299 = vshrl.u32 %v298, 7
    %v300 = vsub.s32 6, %v299
    %v301 = vrot.slane %v28, %v300
    %303 = vbcast.lane.b32.xlu0 %v301, 256
    %v304 = vpop.permute.xlu0 %303
    %v305 = vlaneseq
    %v306 = vshrl.u32 %v305, 7
    %v307 = vsub.s32 7, %v306
    %v308 = vrot.slane %v28, %v307
    %310 = vbcast.lane.b32.xlu0 %v308, 256
    %v311 = vpop.permute.xlu0 %310
    %v312 = vlaneseq
    %v313 = vshrl.u32 %v312, 7
    %v314 = vsub.s32 0, %v313
    %v315 = vrot.slane %v29, %v314
    %317 = vbcast.lane.b32.xlu0 %v315, 256
    %v318 = vpop.permute.xlu0 %317
    %v319 = vlaneseq
    %v320 = vshrl.u32 %v319, 7
    %v321 = vsub.s32 1, %v320
    %v322 = vrot.slane %v29, %v321
    %324 = vbcast.lane.b32.xlu0 %v322, 256
    %v325 = vpop.permute.xlu0 %324
    %v326 = vlaneseq
    %v327 = vshrl.u32 %v326, 7
    %v328 = vsub.s32 2, %v327
    %v329 = vrot.slane %v29, %v328
    %331 = vbcast.lane.b32.xlu0 %v329, 256
    %v332 = vpop.permute.xlu0 %331
    %v333 = vlaneseq
    %v334 = vshrl.u32 %v333, 7
    %v335 = vsub.s32 3, %v334
    %v336 = vrot.slane %v29, %v335
    %338 = vbcast.lane.b32.xlu0 %v336, 256
    %v339 = vpop.permute.xlu0 %338
    %v340 = vlaneseq
    %v341 = vshrl.u32 %v340, 7
    %v342 = vsub.s32 4, %v341
    %v343 = vrot.slane %v29, %v342
    %345 = vbcast.lane.b32.xlu0 %v343, 256
    %v346 = vpop.permute.xlu0 %345
    %v347 = vlaneseq
    %v348 = vshrl.u32 %v347, 7
    %v349 = vsub.s32 5, %v348
    %v350 = vrot.slane %v29, %v349
    %352 = vbcast.lane.b32.xlu0 %v350, 256
    %v353 = vpop.permute.xlu0 %352
    %v354 = vlaneseq
    %v355 = vshrl.u32 %v354, 7
    %v356 = vsub.s32 6, %v355
    %v357 = vrot.slane %v29, %v356
    %359 = vbcast.lane.b32.xlu0 %v357, 256
    %v360 = vpop.permute.xlu0 %359
    %v361 = vlaneseq
    %v362 = vshrl.u32 %v361, 7
    %v363 = vsub.s32 7, %v362
    %v364 = vrot.slane %v29, %v363
    %366 = vbcast.lane.b32.xlu0 %v364, 256
    %v367 = vpop.permute.xlu0 %366
    %v368 = vlaneseq
    %v369 = vshrl.u32 %v368, 7
    %v370 = vsub.s32 0, %v369
    %v371 = vrot.slane %v30, %v370
    %373 = vbcast.lane.b32.xlu0 %v371, 256
    %v374 = vpop.permute.xlu0 %373
    %v375 = vlaneseq
    %v376 = vshrl.u32 %v375, 7
    %v377 = vsub.s32 1, %v376
    %v378 = vrot.slane %v30, %v377
    %380 = vbcast.lane.b32.xlu0 %v378, 256
    %v381 = vpop.permute.xlu0 %380
    %v382 = vlaneseq
    %v383 = vshrl.u32 %v382, 7
    %v384 = vsub.s32 2, %v383
    %v385 = vrot.slane %v30, %v384
    %387 = vbcast.lane.b32.xlu0 %v385, 256
    %v388 = vpop.permute.xlu0 %387
    %v389 = vlaneseq
    %v390 = vshrl.u32 %v389, 7
    %v391 = vsub.s32 3, %v390
    %v392 = vrot.slane %v30, %v391
    %394 = vbcast.lane.b32.xlu0 %v392, 256
    %v395 = vpop.permute.xlu0 %394
    %v396 = vlaneseq
    %v397 = vshrl.u32 %v396, 7
    %v398 = vsub.s32 4, %v397
    %v399 = vrot.slane %v30, %v398
    %401 = vbcast.lane.b32.xlu0 %v399, 256
    %v402 = vpop.permute.xlu0 %401
    %v403 = vlaneseq
    %v404 = vshrl.u32 %v403, 7
    %v405 = vsub.s32 5, %v404
    %v406 = vrot.slane %v30, %v405
    %408 = vbcast.lane.b32.xlu0 %v406, 256
    %v409 = vpop.permute.xlu0 %408
    %v410 = vlaneseq
    %v411 = vshrl.u32 %v410, 7
    %v412 = vsub.s32 6, %v411
    %v413 = vrot.slane %v30, %v412
    %415 = vbcast.lane.b32.xlu0 %v413, 256
    %v416 = vpop.permute.xlu0 %415
    %v417 = vlaneseq
    %v418 = vshrl.u32 %v417, 7
    %v419 = vsub.s32 7, %v418
    %v420 = vrot.slane %v30, %v419
    %422 = vbcast.lane.b32.xlu0 %v420, 256
    %v423 = vpop.permute.xlu0 %422
    %v424 = vlaneseq
    %v425 = vshrl.u32 %v424, 7
    %v426 = vsub.s32 0, %v425
    %v427 = vrot.slane %v31, %v426
    %429 = vbcast.lane.b32.xlu0 %v427, 256
    %v430 = vpop.permute.xlu0 %429
    %v431 = vlaneseq
    %v432 = vshrl.u32 %v431, 7
    %v433 = vsub.s32 1, %v432
    %v434 = vrot.slane %v31, %v433
    %436 = vbcast.lane.b32.xlu0 %v434, 256
    %v437 = vpop.permute.xlu0 %436
    %v438 = vlaneseq
    %v439 = vshrl.u32 %v438, 7
    %v440 = vsub.s32 2, %v439
    %v441 = vrot.slane %v31, %v440
    %443 = vbcast.lane.b32.xlu0 %v441, 256
    %v444 = vpop.permute.xlu0 %443
    %v445 = vlaneseq
    %v446 = vshrl.u32 %v445, 7
    %v447 = vsub.s32 3, %v446
    %v448 = vrot.slane %v31, %v447
    %450 = vbcast.lane.b32.xlu0 %v448, 256
    %v451 = vpop.permute.xlu0 %450
    %v452 = vlaneseq
    %v453 = vshrl.u32 %v452, 7
    %v454 = vsub.s32 4, %v453
    %v455 = vrot.slane %v31, %v454
    %457 = vbcast.lane.b32.xlu0 %v455, 256
    %v458 = vpop.permute.xlu0 %457
    %v459 = vlaneseq
    %v460 = vshrl.u32 %v459, 7
    %v461 = vsub.s32 5, %v460
    %v462 = vrot.slane %v31, %v461
    %464 = vbcast.lane.b32.xlu0 %v462, 256
    %v465 = vpop.permute.xlu0 %464
    %v466 = vlaneseq
    %v467 = vshrl.u32 %v466, 7
    %v468 = vsub.s32 6, %v467
    %v469 = vrot.slane %v31, %v468
    %471 = vbcast.lane.b32.xlu0 %v469, 256
    %v472 = vpop.permute.xlu0 %471
    %v473 = vlaneseq
    %v474 = vshrl.u32 %v473, 7
    %v475 = vsub.s32 7, %v474
    %v476 = vrot.slane %v31, %v475
    %478 = vbcast.lane.b32.xlu0 %v476, 256
    %v479 = vpop.permute.xlu0 %478
    %v481 = vlaneseq
    %v482 = vshrl.u32 %v481, 7
    %v483 = vsub.s32 0, %v482
    %v484 = vrot.slane %v22, %v483
    %v486 = vmul.f32 %v38, %v484
    %v487 = vmul.f32 %v45, %v484
    %v488 = vmul.f32 %v52, %v484
    %v489 = vmul.f32 %v59, %v484
    %v490 = vmul.f32 %v66, %v484
    %v491 = vmul.f32 %v73, %v484
    %v492 = vmul.f32 %v80, %v484
    %v493 = vmul.f32 %v87, %v484
    %v494 = vmul.f32 %v94, %v484
    %v495 = vmul.f32 %v101, %v484
    %v496 = vmul.f32 %v108, %v484
    %v497 = vmul.f32 %v115, %v484
    %v498 = vmul.f32 %v122, %v484
    %v499 = vmul.f32 %v129, %v484
    %v500 = vmul.f32 %v136, %v484
    %v501 = vmul.f32 %v143, %v484
    %v502 = vmul.f32 %v150, %v484
    %v503 = vmul.f32 %v157, %v484
    %v504 = vmul.f32 %v164, %v484
    %v505 = vmul.f32 %v171, %v484
    %v506 = vmul.f32 %v178, %v484
    %v507 = vmul.f32 %v185, %v484
    %v508 = vmul.f32 %v192, %v484
    %v509 = vmul.f32 %v199, %v484
    %v510 = vmul.f32 %v206, %v484
    %v511 = vmul.f32 %v213, %v484
    %v512 = vmul.f32 %v220, %v484
    %v513 = vmul.f32 %v227, %v484
    %v514 = vmul.f32 %v234, %v484
    %v515 = vmul.f32 %v241, %v484
    %v516 = vmul.f32 %v248, %v484
    %v517 = vmul.f32 %v255, %v484
    %v518 = vmul.f32 %v262, %v484
    %v519 = vmul.f32 %v269, %v484
    %v520 = vmul.f32 %v276, %v484
    %v521 = vmul.f32 %v283, %v484
    %v522 = vmul.f32 %v290, %v484
    %v523 = vmul.f32 %v297, %v484
    %v524 = vmul.f32 %v304, %v484
    %v525 = vmul.f32 %v311, %v484
    %v526 = vmul.f32 %v318, %v484
    %v527 = vmul.f32 %v325, %v484
    %v528 = vmul.f32 %v332, %v484
    %v529 = vmul.f32 %v339, %v484
    %v530 = vmul.f32 %v346, %v484
    %v531 = vmul.f32 %v353, %v484
    %v532 = vmul.f32 %v360, %v484
    %v533 = vmul.f32 %v367, %v484
    %v534 = vmul.f32 %v374, %v484
    %v535 = vmul.f32 %v381, %v484
    %v536 = vmul.f32 %v388, %v484
    %v537 = vmul.f32 %v395, %v484
    %v538 = vmul.f32 %v402, %v484
    %v539 = vmul.f32 %v409, %v484
    %v540 = vmul.f32 %v416, %v484
    %v541 = vmul.f32 %v423, %v484
    %v542 = vmul.f32 %v430, %v484
    %v543 = vmul.f32 %v437, %v484
    %v544 = vmul.f32 %v444, %v484
    %v545 = vmul.f32 %v451, %v484
    %v546 = vmul.f32 %v458, %v484
    %v547 = vmul.f32 %v465, %v484
    %v548 = vmul.f32 %v472, %v484
    %v549 = vmul.f32 %v479, %v484
    %v551 = vlaneseq
    %v552 = vshrl.u32 %v551, 7
    %v553 = vsub.s32 0, %v552
    %v554 = vrot.slane %v23, %v553
    %v556 = vadd.f32 %v486, %v554
    %v557 = vadd.f32 %v487, %v554
    %v558 = vadd.f32 %v488, %v554
    %v559 = vadd.f32 %v489, %v554
    %v560 = vadd.f32 %v490, %v554
    %v561 = vadd.f32 %v491, %v554
    %v562 = vadd.f32 %v492, %v554
    %v563 = vadd.f32 %v493, %v554
    %v564 = vadd.f32 %v494, %v554
    %v565 = vadd.f32 %v495, %v554
    %v566 = vadd.f32 %v496, %v554
    %v567 = vadd.f32 %v497, %v554
    %v568 = vadd.f32 %v498, %v554
    %v569 = vadd.f32 %v499, %v554
    %v570 = vadd.f32 %v500, %v554
    %v571 = vadd.f32 %v501, %v554
    %v572 = vadd.f32 %v502, %v554
    %v573 = vadd.f32 %v503, %v554
    %v574 = vadd.f32 %v504, %v554
    %v575 = vadd.f32 %v505, %v554
    %v576 = vadd.f32 %v506, %v554
    %v577 = vadd.f32 %v507, %v554
    %v578 = vadd.f32 %v508, %v554
    %v579 = vadd.f32 %v509, %v554
    %v580 = vadd.f32 %v510, %v554
    %v581 = vadd.f32 %v511, %v554
    %v582 = vadd.f32 %v512, %v554
    %v583 = vadd.f32 %v513, %v554
    %v584 = vadd.f32 %v514, %v554
    %v585 = vadd.f32 %v515, %v554
    %v586 = vadd.f32 %v516, %v554
    %v587 = vadd.f32 %v517, %v554
    %v588 = vadd.f32 %v518, %v554
    %v589 = vadd.f32 %v519, %v554
    %v590 = vadd.f32 %v520, %v554
    %v591 = vadd.f32 %v521, %v554
    %v592 = vadd.f32 %v522, %v554
    %v593 = vadd.f32 %v523, %v554
    %v594 = vadd.f32 %v524, %v554
    %v595 = vadd.f32 %v525, %v554
    %v596 = vadd.f32 %v526, %v554
    %v597 = vadd.f32 %v527, %v554
    %v598 = vadd.f32 %v528, %v554
    %v599 = vadd.f32 %v529, %v554
    %v600 = vadd.f32 %v530, %v554
    %v601 = vadd.f32 %v531, %v554
    %v602 = vadd.f32 %v532, %v554
    %v603 = vadd.f32 %v533, %v554
    %v604 = vadd.f32 %v534, %v554
    %v605 = vadd.f32 %v535, %v554
    %v606 = vadd.f32 %v536, %v554
    %v607 = vadd.f32 %v537, %v554
    %v608 = vadd.f32 %v538, %v554
    %v609 = vadd.f32 %v539, %v554
    %v610 = vadd.f32 %v540, %v554
    %v611 = vadd.f32 %v541, %v554
    %v612 = vadd.f32 %v542, %v554
    %v613 = vadd.f32 %v543, %v554
    %v614 = vadd.f32 %v544, %v554
    %v615 = vadd.f32 %v545, %v554
    %v616 = vadd.f32 %v546, %v554
    %v617 = vadd.f32 %v547, %v554
    %v618 = vadd.f32 %v548, %v554
    %v619 = vadd.f32 %v549, %v554
    %v620 = vmul.f32 %v556, 0.5
    %v621 = vmul.f32 %v557, 0.5
    %v622 = vmul.f32 %v558, 0.5
    %v623 = vmul.f32 %v559, 0.5
    %v624 = vmul.f32 %v560, 0.5
    %v625 = vmul.f32 %v561, 0.5
    %v626 = vmul.f32 %v562, 0.5
    %v627 = vmul.f32 %v563, 0.5
    %v628 = vmul.f32 %v564, 0.5
    %v629 = vmul.f32 %v565, 0.5
    %v630 = vmul.f32 %v566, 0.5
    %v631 = vmul.f32 %v567, 0.5
    %v632 = vmul.f32 %v568, 0.5
    %v633 = vmul.f32 %v569, 0.5
    %v634 = vmul.f32 %v570, 0.5
    %v635 = vmul.f32 %v571, 0.5
    %v636 = vmul.f32 %v572, 0.5
    %v637 = vmul.f32 %v573, 0.5
    %v638 = vmul.f32 %v574, 0.5
    %v639 = vmul.f32 %v575, 0.5
    %v640 = vmul.f32 %v576, 0.5
    %v641 = vmul.f32 %v577, 0.5
    %v642 = vmul.f32 %v578, 0.5
    %v643 = vmul.f32 %v579, 0.5
    %v644 = vmul.f32 %v580, 0.5
    %v645 = vmul.f32 %v581, 0.5
    %v646 = vmul.f32 %v582, 0.5
    %v647 = vmul.f32 %v583, 0.5
    %v648 = vmul.f32 %v584, 0.5
    %v649 = vmul.f32 %v585, 0.5
    %v650 = vmul.f32 %v586, 0.5
    %v651 = vmul.f32 %v587, 0.5
    %v652 = vmul.f32 %v588, 0.5
    %v653 = vmul.f32 %v589, 0.5
    %v654 = vmul.f32 %v590, 0.5
    %v655 = vmul.f32 %v591, 0.5
    %v656 = vmul.f32 %v592, 0.5
    %v657 = vmul.f32 %v593, 0.5
    %v658 = vmul.f32 %v594, 0.5
    %v659 = vmul.f32 %v595, 0.5
    %v660 = vmul.f32 %v596, 0.5
    %v661 = vmul.f32 %v597, 0.5
    %v662 = vmul.f32 %v598, 0.5
    %v663 = vmul.f32 %v599, 0.5
    %v664 = vmul.f32 %v600, 0.5
    %v665 = vmul.f32 %v601, 0.5
    %v666 = vmul.f32 %v602, 0.5
    %v667 = vmul.f32 %v603, 0.5
    %v668 = vmul.f32 %v604, 0.5
    %v669 = vmul.f32 %v605, 0.5
    %v670 = vmul.f32 %v606, 0.5
    %v671 = vmul.f32 %v607, 0.5
    %v672 = vmul.f32 %v608, 0.5
    %v673 = vmul.f32 %v609, 0.5
    %v674 = vmul.f32 %v610, 0.5
    %v675 = vmul.f32 %v611, 0.5
    %v676 = vmul.f32 %v612, 0.5
    %v677 = vmul.f32 %v613, 0.5
    %v678 = vmul.f32 %v614, 0.5
    %v679 = vmul.f32 %v615, 0.5
    %v680 = vmul.f32 %v616, 0.5
    %v681 = vmul.f32 %v617, 0.5
    %v682 = vmul.f32 %v618, 0.5
    %v683 = vmul.f32 %v619, 0.5
    %v684 = vmul.f32 %v556, 0.044715
    %v685 = vmul.f32 %v557, 0.044715
    %v686 = vmul.f32 %v558, 0.044715
    %v687 = vmul.f32 %v559, 0.044715
    %v688 = vmul.f32 %v560, 0.044715
    %v689 = vmul.f32 %v561, 0.044715
    %v690 = vmul.f32 %v562, 0.044715
    %v691 = vmul.f32 %v563, 0.044715
    %v692 = vmul.f32 %v564, 0.044715
    %v693 = vmul.f32 %v565, 0.044715
    %v694 = vmul.f32 %v566, 0.044715
    %v695 = vmul.f32 %v567, 0.044715
    %v696 = vmul.f32 %v568, 0.044715
    %v697 = vmul.f32 %v569, 0.044715
    %v698 = vmul.f32 %v570, 0.044715
    %v699 = vmul.f32 %v571, 0.044715
    %v700 = vmul.f32 %v572, 0.044715
    %v701 = vmul.f32 %v573, 0.044715
    %v702 = vmul.f32 %v574, 0.044715
    %v703 = vmul.f32 %v575, 0.044715
    %v704 = vmul.f32 %v576, 0.044715
    %v705 = vmul.f32 %v577, 0.044715
    %v706 = vmul.f32 %v578, 0.044715
    %v707 = vmul.f32 %v579, 0.044715
    %v708 = vmul.f32 %v580, 0.044715
    %v709 = vmul.f32 %v581, 0.044715
    %v710 = vmul.f32 %v582, 0.044715
    %v711 = vmul.f32 %v583, 0.044715
    %v712 = vmul.f32 %v584, 0.044715
    %v713 = vmul.f32 %v585, 0.044715
    %v714 = vmul.f32 %v586, 0.044715
    %v715 = vmul.f32 %v587, 0.044715
    %v716 = vmul.f32 %v588, 0.044715
    %v717 = vmul.f32 %v589, 0.044715
    %v718 = vmul.f32 %v590, 0.044715
    %v719 = vmul.f32 %v591, 0.044715
    %v720 = vmul.f32 %v592, 0.044715
    %v721 = vmul.f32 %v593, 0.044715
    %v722 = vmul.f32 %v594, 0.044715
    %v723 = vmul.f32 %v595, 0.044715
    %v724 = vmul.f32 %v596, 0.044715
    %v725 = vmul.f32 %v597, 0.044715
    %v726 = vmul.f32 %v598, 0.044715
    %v727 = vmul.f32 %v599, 0.044715
    %v728 = vmul.f32 %v600, 0.044715
    %v729 = vmul.f32 %v601, 0.044715
    %v730 = vmul.f32 %v602, 0.044715
    %v731 = vmul.f32 %v603, 0.044715
    %v732 = vmul.f32 %v604, 0.044715
    %v733 = vmul.f32 %v605, 0.044715
    %v734 = vmul.f32 %v606, 0.044715
    %v735 = vmul.f32 %v607, 0.044715
    %v736 = vmul.f32 %v608, 0.044715
    %v737 = vmul.f32 %v609, 0.044715
    %v738 = vmul.f32 %v610, 0.044715
    %v739 = vmul.f32 %v611, 0.044715
    %v740 = vmul.f32 %v612, 0.044715
    %v741 = vmul.f32 %v613, 0.044715
    %v742 = vmul.f32 %v614, 0.044715
    %v743 = vmul.f32 %v615, 0.044715
    %v744 = vmul.f32 %v616, 0.044715
    %v745 = vmul.f32 %v617, 0.044715
    %v746 = vmul.f32 %v618, 0.044715
    %v747 = vmul.f32 %v619, 0.044715
    %v748 = vmul.f32 %v684, %v556
    %v749 = vmul.f32 %v685, %v557
    %v750 = vmul.f32 %v686, %v558
    %v751 = vmul.f32 %v687, %v559
    %v752 = vmul.f32 %v688, %v560
    %v753 = vmul.f32 %v689, %v561
    %v754 = vmul.f32 %v690, %v562
    %v755 = vmul.f32 %v691, %v563
    %v756 = vmul.f32 %v692, %v564
    %v757 = vmul.f32 %v693, %v565
    %v758 = vmul.f32 %v694, %v566
    %v759 = vmul.f32 %v695, %v567
    %v760 = vmul.f32 %v696, %v568
    %v761 = vmul.f32 %v697, %v569
    %v762 = vmul.f32 %v698, %v570
    %v763 = vmul.f32 %v699, %v571
    %v764 = vmul.f32 %v700, %v572
    %v765 = vmul.f32 %v701, %v573
    %v766 = vmul.f32 %v702, %v574
    %v767 = vmul.f32 %v703, %v575
    %v768 = vmul.f32 %v704, %v576
    %v769 = vmul.f32 %v705, %v577
    %v770 = vmul.f32 %v706, %v578
    %v771 = vmul.f32 %v707, %v579
    %v772 = vmul.f32 %v708, %v580
    %v773 = vmul.f32 %v709, %v581
    %v774 = vmul.f32 %v710, %v582
    %v775 = vmul.f32 %v711, %v583
    %v776 = vmul.f32 %v712, %v584
    %v777 = vmul.f32 %v713, %v585
    %v778 = vmul.f32 %v714, %v586
    %v779 = vmul.f32 %v715, %v587
    %v780 = vmul.f32 %v716, %v588
    %v781 = vmul.f32 %v717, %v589
    %v782 = vmul.f32 %v718, %v590
    %v783 = vmul.f32 %v719, %v591
    %v784 = vmul.f32 %v720, %v592
    %v785 = vmul.f32 %v721, %v593
    %v786 = vmul.f32 %v722, %v594
    %v787 = vmul.f32 %v723, %v595
    %v788 = vmul.f32 %v724, %v596
    %v789 = vmul.f32 %v725, %v597
    %v790 = vmul.f32 %v726, %v598
    %v791 = vmul.f32 %v727, %v599
    %v792 = vmul.f32 %v728, %v600
    %v793 = vmul.f32 %v729, %v601
    %v794 = vmul.f32 %v730, %v602
    %v795 = vmul.f32 %v731, %v603
    %v796 = vmul.f32 %v732, %v604
    %v797 = vmul.f32 %v733, %v605
    %v798 = vmul.f32 %v734, %v606
    %v799 = vmul.f32 %v735, %v607
    %v800 = vmul.f32 %v736, %v608
    %v801 = vmul.f32 %v737, %v609
    %v802 = vmul.f32 %v738, %v610
    %v803 = vmul.f32 %v739, %v611
    %v804 = vmul.f32 %v740, %v612
    %v805 = vmul.f32 %v741, %v613
    %v806 = vmul.f32 %v742, %v614
    %v807 = vmul.f32 %v743, %v615
    %v808 = vmul.f32 %v744, %v616
    %v809 = vmul.f32 %v745, %v617
    %v810 = vmul.f32 %v746, %v618
    %v811 = vmul.f32 %v747, %v619
    %v812 = vmul.f32 %v748, %v556
    %v813 = vmul.f32 %v749, %v557
    %v814 = vmul.f32 %v750, %v558
    %v815 = vmul.f32 %v751, %v559
    %v816 = vmul.f32 %v752, %v560
    %v817 = vmul.f32 %v753, %v561
    %v818 = vmul.f32 %v754, %v562
    %v819 = vmul.f32 %v755, %v563
    %v820 = vmul.f32 %v756, %v564
    %v821 = vmul.f32 %v757, %v565
    %v822 = vmul.f32 %v758, %v566
    %v823 = vmul.f32 %v759, %v567
    %v824 = vmul.f32 %v760, %v568
    %v825 = vmul.f32 %v761, %v569
    %v826 = vmul.f32 %v762, %v570
    %v827 = vmul.f32 %v763, %v571
    %v828 = vmul.f32 %v764, %v572
    %v829 = vmul.f32 %v765, %v573
    %v830 = vmul.f32 %v766, %v574
    %v831 = vmul.f32 %v767, %v575
    %v832 = vmul.f32 %v768, %v576
    %v833 = vmul.f32 %v769, %v577
    %v834 = vmul.f32 %v770, %v578
    %v835 = vmul.f32 %v771, %v579
    %v836 = vmul.f32 %v772, %v580
    %v837 = vmul.f32 %v773, %v581
    %v838 = vmul.f32 %v774, %v582
    %v839 = vmul.f32 %v775, %v583
    %v840 = vmul.f32 %v776, %v584
    %v841 = vmul.f32 %v777, %v585
    %v842 = vmul.f32 %v778, %v586
    %v843 = vmul.f32 %v779, %v587
    %v844 = vmul.f32 %v780, %v588
    %v845 = vmul.f32 %v781, %v589
    %v846 = vmul.f32 %v782, %v590
    %v847 = vmul.f32 %v783, %v591
    %v848 = vmul.f32 %v784, %v592
    %v849 = vmul.f32 %v785, %v593
    %v850 = vmul.f32 %v786, %v594
    %v851 = vmul.f32 %v787, %v595
    %v852 = vmul.f32 %v788, %v596
    %v853 = vmul.f32 %v789, %v597
    %v854 = vmul.f32 %v790, %v598
    %v855 = vmul.f32 %v791, %v599
    %v856 = vmul.f32 %v792, %v600
    %v857 = vmul.f32 %v793, %v601
    %v858 = vmul.f32 %v794, %v602
    %v859 = vmul.f32 %v795, %v603
    %v860 = vmul.f32 %v796, %v604
    %v861 = vmul.f32 %v797, %v605
    %v862 = vmul.f32 %v798, %v606
    %v863 = vmul.f32 %v799, %v607
    %v864 = vmul.f32 %v800, %v608
    %v865 = vmul.f32 %v801, %v609
    %v866 = vmul.f32 %v802, %v610
    %v867 = vmul.f32 %v803, %v611
    %v868 = vmul.f32 %v804, %v612
    %v869 = vmul.f32 %v805, %v613
    %v870 = vmul.f32 %v806, %v614
    %v871 = vmul.f32 %v807, %v615
    %v872 = vmul.f32 %v808, %v616
    %v873 = vmul.f32 %v809, %v617
    %v874 = vmul.f32 %v810, %v618
    %v875 = vmul.f32 %v811, %v619
    %v876 = vadd.f32 %v556, %v812
    %v877 = vadd.f32 %v557, %v813
    %v878 = vadd.f32 %v558, %v814
    %v879 = vadd.f32 %v559, %v815
    %v880 = vadd.f32 %v560, %v816
    %v881 = vadd.f32 %v561, %v817
    %v882 = vadd.f32 %v562, %v818
    %v883 = vadd.f32 %v563, %v819
    %v884 = vadd.f32 %v564, %v820
    %v885 = vadd.f32 %v565, %v821
    %v886 = vadd.f32 %v566, %v822
    %v887 = vadd.f32 %v567, %v823
    %v888 = vadd.f32 %v568, %v824
    %v889 = vadd.f32 %v569, %v825
    %v890 = vadd.f32 %v570, %v826
    %v891 = vadd.f32 %v571, %v827
    %v892 = vadd.f32 %v572, %v828
    %v893 = vadd.f32 %v573, %v829
    %v894 = vadd.f32 %v574, %v830
    %v895 = vadd.f32 %v575, %v831
    %v896 = vadd.f32 %v576, %v832
    %v897 = vadd.f32 %v577, %v833
    %v898 = vadd.f32 %v578, %v834
    %v899 = vadd.f32 %v579, %v835
    %v900 = vadd.f32 %v580, %v836
    %v901 = vadd.f32 %v581, %v837
    %v902 = vadd.f32 %v582, %v838
    %v903 = vadd.f32 %v583, %v839
    %v904 = vadd.f32 %v584, %v840
    %v905 = vadd.f32 %v585, %v841
    %v906 = vadd.f32 %v586, %v842
    %v907 = vadd.f32 %v587, %v843
    %v908 = vadd.f32 %v588, %v844
    %v909 = vadd.f32 %v589, %v845
    %v910 = vadd.f32 %v590, %v846
    %v911 = vadd.f32 %v591, %v847
    %v912 = vadd.f32 %v592, %v848
    %v913 = vadd.f32 %v593, %v849
    %v914 = vadd.f32 %v594, %v850
    %v915 = vadd.f32 %v595, %v851
    %v916 = vadd.f32 %v596, %v852
    %v917 = vadd.f32 %v597, %v853
    %v918 = vadd.f32 %v598, %v854
    %v919 = vadd.f32 %v599, %v855
    %v920 = vadd.f32 %v600, %v856
    %v921 = vadd.f32 %v601, %v857
    %v922 = vadd.f32 %v602, %v858
    %v923 = vadd.f32 %v603, %v859
    %v924 = vadd.f32 %v604, %v860
    %v925 = vadd.f32 %v605, %v861
    %v926 = vadd.f32 %v606, %v862
    %v927 = vadd.f32 %v607, %v863
    %v928 = vadd.f32 %v608, %v864
    %v929 = vadd.f32 %v609, %v865
    %v930 = vadd.f32 %v610, %v866
    %v931 = vadd.f32 %v611, %v867
    %v932 = vadd.f32 %v612, %v868
    %v933 = vadd.f32 %v613, %v869
    %v934 = vadd.f32 %v614, %v870
    %v935 = vadd.f32 %v615, %v871
    %v936 = vadd.f32 %v616, %v872
    %v937 = vadd.f32 %v617, %v873
    %v938 = vadd.f32 %v618, %v874
    %v939 = vadd.f32 %v619, %v875
    %v940 = vmul.f32 %v876, 0.7978846
    %v941 = vmul.f32 %v877, 0.7978846
    %v942 = vmul.f32 %v878, 0.7978846
    %v943 = vmul.f32 %v879, 0.7978846
    %v944 = vmul.f32 %v880, 0.7978846
    %v945 = vmul.f32 %v881, 0.7978846
    %v946 = vmul.f32 %v882, 0.7978846
    %v947 = vmul.f32 %v883, 0.7978846
    %v948 = vmul.f32 %v884, 0.7978846
    %v949 = vmul.f32 %v885, 0.7978846
    %v950 = vmul.f32 %v886, 0.7978846
    %v951 = vmul.f32 %v887, 0.7978846
    %v952 = vmul.f32 %v888, 0.7978846
    %v953 = vmul.f32 %v889, 0.7978846
    %v954 = vmul.f32 %v890, 0.7978846
    %v955 = vmul.f32 %v891, 0.7978846
    %v956 = vmul.f32 %v892, 0.7978846
    %v957 = vmul.f32 %v893, 0.7978846
    %v958 = vmul.f32 %v894, 0.7978846
    %v959 = vmul.f32 %v895, 0.7978846
    %v960 = vmul.f32 %v896, 0.7978846
    %v961 = vmul.f32 %v897, 0.7978846
    %v962 = vmul.f32 %v898, 0.7978846
    %v963 = vmul.f32 %v899, 0.7978846
    %v964 = vmul.f32 %v900, 0.7978846
    %v965 = vmul.f32 %v901, 0.7978846
    %v966 = vmul.f32 %v902, 0.7978846
    %v967 = vmul.f32 %v903, 0.7978846
    %v968 = vmul.f32 %v904, 0.7978846
    %v969 = vmul.f32 %v905, 0.7978846
    %v970 = vmul.f32 %v906, 0.7978846
    %v971 = vmul.f32 %v907, 0.7978846
    %v972 = vmul.f32 %v908, 0.7978846
    %v973 = vmul.f32 %v909, 0.7978846
    %v974 = vmul.f32 %v910, 0.7978846
    %v975 = vmul.f32 %v911, 0.7978846
    %v976 = vmul.f32 %v912, 0.7978846
    %v977 = vmul.f32 %v913, 0.7978846
    %v978 = vmul.f32 %v914, 0.7978846
    %v979 = vmul.f32 %v915, 0.7978846
    %v980 = vmul.f32 %v916, 0.7978846
    %v981 = vmul.f32 %v917, 0.7978846
    %v982 = vmul.f32 %v918, 0.7978846
    %v983 = vmul.f32 %v919, 0.7978846
    %v984 = vmul.f32 %v920, 0.7978846
    %v985 = vmul.f32 %v921, 0.7978846
    %v986 = vmul.f32 %v922, 0.7978846
    %v987 = vmul.f32 %v923, 0.7978846
    %v988 = vmul.f32 %v924, 0.7978846
    %v989 = vmul.f32 %v925, 0.7978846
    %v990 = vmul.f32 %v926, 0.7978846
    %v991 = vmul.f32 %v927, 0.7978846
    %v992 = vmul.f32 %v928, 0.7978846
    %v993 = vmul.f32 %v929, 0.7978846
    %v994 = vmul.f32 %v930, 0.7978846
    %v995 = vmul.f32 %v931, 0.7978846
    %v996 = vmul.f32 %v932, 0.7978846
    %v997 = vmul.f32 %v933, 0.7978846
    %v998 = vmul.f32 %v934, 0.7978846
    %v999 = vmul.f32 %v935, 0.7978846
    %v1000 = vmul.f32 %v936, 0.7978846
    %v1001 = vmul.f32 %v937, 0.7978846
    %v1002 = vmul.f32 %v938, 0.7978846
    %v1003 = vmul.f32 %v939, 0.7978846
    %v1004 = vtanh.pop %v940
    %v1005 = vtanh.pop %v941
    %v1006 = vtanh.pop %v942
    %v1007 = vtanh.pop %v943
    %v1008 = vtanh.pop %v944
    %v1009 = vtanh.pop %v945
    %v1010 = vtanh.pop %v946
    %v1011 = vtanh.pop %v947
    %v1012 = vtanh.pop %v948
    %v1013 = vtanh.pop %v949
    %v1014 = vtanh.pop %v950
    %v1015 = vtanh.pop %v951
    %v1016 = vtanh.pop %v952
    %v1017 = vtanh.pop %v953
    %v1018 = vtanh.pop %v954
    %v1019 = vtanh.pop %v955
    %v1020 = vtanh.pop %v956
    %v1021 = vtanh.pop %v957
    %v1022 = vtanh.pop %v958
    %v1023 = vtanh.pop %v959
    %v1024 = vtanh.pop %v960
    %v1025 = vtanh.pop %v961
    %v1026 = vtanh.pop %v962
    %v1027 = vtanh.pop %v963
    %v1028 = vtanh.pop %v964
    %v1029 = vtanh.pop %v965
    %v1030 = vtanh.pop %v966
    %v1031 = vtanh.pop %v967
    %v1032 = vtanh.pop %v968
    %v1033 = vtanh.pop %v969
    %v1034 = vtanh.pop %v970
    %v1035 = vtanh.pop %v971
    %v1036 = vtanh.pop %v972
    %v1037 = vtanh.pop %v973
    %v1038 = vtanh.pop %v974
    %v1039 = vtanh.pop %v975
    %v1040 = vtanh.pop %v976
    %v1041 = vtanh.pop %v977
    %v1042 = vtanh.pop %v978
    %v1043 = vtanh.pop %v979
    %v1044 = vtanh.pop %v980
    %v1045 = vtanh.pop %v981
    %v1046 = vtanh.pop %v982
    %v1047 = vtanh.pop %v983
    %v1048 = vtanh.pop %v984
    %v1049 = vtanh.pop %v985
    %v1050 = vtanh.pop %v986
    %v1051 = vtanh.pop %v987
    %v1052 = vtanh.pop %v988
    %v1053 = vtanh.pop %v989
    %v1054 = vtanh.pop %v990
    %v1055 = vtanh.pop %v991
    %v1056 = vtanh.pop %v992
    %v1057 = vtanh.pop %v993
    %v1058 = vtanh.pop %v994
    %v1059 = vtanh.pop %v995
    %v1060 = vtanh.pop %v996
    %v1061 = vtanh.pop %v997
    %v1062 = vtanh.pop %v998
    %v1063 = vtanh.pop %v999
    %v1064 = vtanh.pop %v1000
    %v1065 = vtanh.pop %v1001
    %v1066 = vtanh.pop %v1002
    %v1067 = vtanh.pop %v1003
    %v1068 = vadd.f32 %v1004, 1.0
    %v1069 = vadd.f32 %v1005, 1.0
    %v1070 = vadd.f32 %v1006, 1.0
    %v1071 = vadd.f32 %v1007, 1.0
    %v1072 = vadd.f32 %v1008, 1.0
    %v1073 = vadd.f32 %v1009, 1.0
    %v1074 = vadd.f32 %v1010, 1.0
    %v1075 = vadd.f32 %v1011, 1.0
    %v1076 = vadd.f32 %v1012, 1.0
    %v1077 = vadd.f32 %v1013, 1.0
    %v1078 = vadd.f32 %v1014, 1.0
    %v1079 = vadd.f32 %v1015, 1.0
    %v1080 = vadd.f32 %v1016, 1.0
    %v1081 = vadd.f32 %v1017, 1.0
    %v1082 = vadd.f32 %v1018, 1.0
    %v1083 = vadd.f32 %v1019, 1.0
    %v1084 = vadd.f32 %v1020, 1.0
    %v1085 = vadd.f32 %v1021, 1.0
    %v1086 = vadd.f32 %v1022, 1.0
    %v1087 = vadd.f32 %v1023, 1.0
    %v1088 = vadd.f32 %v1024, 1.0
    %v1089 = vadd.f32 %v1025, 1.0
    %v1090 = vadd.f32 %v1026, 1.0
    %v1091 = vadd.f32 %v1027, 1.0
    %v1092 = vadd.f32 %v1028, 1.0
    %v1093 = vadd.f32 %v1029, 1.0
    %v1094 = vadd.f32 %v1030, 1.0
    %v1095 = vadd.f32 %v1031, 1.0
    %v1096 = vadd.f32 %v1032, 1.0
    %v1097 = vadd.f32 %v1033, 1.0
    %v1098 = vadd.f32 %v1034, 1.0
    %v1099 = vadd.f32 %v1035, 1.0
    %v1100 = vadd.f32 %v1036, 1.0
    %v1101 = vadd.f32 %v1037, 1.0
    %v1102 = vadd.f32 %v1038, 1.0
    %v1103 = vadd.f32 %v1039, 1.0
    %v1104 = vadd.f32 %v1040, 1.0
    %v1105 = vadd.f32 %v1041, 1.0
    %v1106 = vadd.f32 %v1042, 1.0
    %v1107 = vadd.f32 %v1043, 1.0
    %v1108 = vadd.f32 %v1044, 1.0
    %v1109 = vadd.f32 %v1045, 1.0
    %v1110 = vadd.f32 %v1046, 1.0
    %v1111 = vadd.f32 %v1047, 1.0
    %v1112 = vadd.f32 %v1048, 1.0
    %v1113 = vadd.f32 %v1049, 1.0
    %v1114 = vadd.f32 %v1050, 1.0
    %v1115 = vadd.f32 %v1051, 1.0
    %v1116 = vadd.f32 %v1052, 1.0
    %v1117 = vadd.f32 %v1053, 1.0
    %v1118 = vadd.f32 %v1054, 1.0
    %v1119 = vadd.f32 %v1055, 1.0
    %v1120 = vadd.f32 %v1056, 1.0
    %v1121 = vadd.f32 %v1057, 1.0
    %v1122 = vadd.f32 %v1058, 1.0
    %v1123 = vadd.f32 %v1059, 1.0
    %v1124 = vadd.f32 %v1060, 1.0
    %v1125 = vadd.f32 %v1061, 1.0
    %v1126 = vadd.f32 %v1062, 1.0
    %v1127 = vadd.f32 %v1063, 1.0
    %v1128 = vadd.f32 %v1064, 1.0
    %v1129 = vadd.f32 %v1065, 1.0
    %v1130 = vadd.f32 %v1066, 1.0
    %v1131 = vadd.f32 %v1067, 1.0
    %v1132 = vmul.f32 %v620, %v1068
    %v1133 = vmul.f32 %v621, %v1069
    %v1134 = vmul.f32 %v622, %v1070
    %v1135 = vmul.f32 %v623, %v1071
    %v1136 = vmul.f32 %v624, %v1072
    %v1137 = vmul.f32 %v625, %v1073
    %v1138 = vmul.f32 %v626, %v1074
    %v1139 = vmul.f32 %v627, %v1075
    %v1140 = vmul.f32 %v628, %v1076
    %v1141 = vmul.f32 %v629, %v1077
    %v1142 = vmul.f32 %v630, %v1078
    %v1143 = vmul.f32 %v631, %v1079
    %v1144 = vmul.f32 %v632, %v1080
    %v1145 = vmul.f32 %v633, %v1081
    %v1146 = vmul.f32 %v634, %v1082
    %v1147 = vmul.f32 %v635, %v1083
    %v1148 = vmul.f32 %v636, %v1084
    %v1149 = vmul.f32 %v637, %v1085
    %v1150 = vmul.f32 %v638, %v1086
    %v1151 = vmul.f32 %v639, %v1087
    %v1152 = vmul.f32 %v640, %v1088
    %v1153 = vmul.f32 %v641, %v1089
    %v1154 = vmul.f32 %v642, %v1090
    %v1155 = vmul.f32 %v643, %v1091
    %v1156 = vmul.f32 %v644, %v1092
    %v1157 = vmul.f32 %v645, %v1093
    %v1158 = vmul.f32 %v646, %v1094
    %v1159 = vmul.f32 %v647, %v1095
    %v1160 = vmul.f32 %v648, %v1096
    %v1161 = vmul.f32 %v649, %v1097
    %v1162 = vmul.f32 %v650, %v1098
    %v1163 = vmul.f32 %v651, %v1099
    %v1164 = vmul.f32 %v652, %v1100
    %v1165 = vmul.f32 %v653, %v1101
    %v1166 = vmul.f32 %v654, %v1102
    %v1167 = vmul.f32 %v655, %v1103
    %v1168 = vmul.f32 %v656, %v1104
    %v1169 = vmul.f32 %v657, %v1105
    %v1170 = vmul.f32 %v658, %v1106
    %v1171 = vmul.f32 %v659, %v1107
    %v1172 = vmul.f32 %v660, %v1108
    %v1173 = vmul.f32 %v661, %v1109
    %v1174 = vmul.f32 %v662, %v1110
    %v1175 = vmul.f32 %v663, %v1111
    %v1176 = vmul.f32 %v664, %v1112
    %v1177 = vmul.f32 %v665, %v1113
    %v1178 = vmul.f32 %v666, %v1114
    %v1179 = vmul.f32 %v667, %v1115
    %v1180 = vmul.f32 %v668, %v1116
    %v1181 = vmul.f32 %v669, %v1117
    %v1182 = vmul.f32 %v670, %v1118
    %v1183 = vmul.f32 %v671, %v1119
    %v1184 = vmul.f32 %v672, %v1120
    %v1185 = vmul.f32 %v673, %v1121
    %v1186 = vmul.f32 %v674, %v1122
    %v1187 = vmul.f32 %v675, %v1123
    %v1188 = vmul.f32 %v676, %v1124
    %v1189 = vmul.f32 %v677, %v1125
    %v1190 = vmul.f32 %v678, %v1126
    %v1191 = vmul.f32 %v679, %v1127
    %v1192 = vmul.f32 %v680, %v1128
    %v1193 = vmul.f32 %v681, %v1129
    %v1194 = vmul.f32 %v682, %v1130
    %v1195 = vmul.f32 %v683, %v1131
    %v1196 = vpack.c.bf16 %v1133, %v1132
    %v1197 = vpack.c.bf16 %v1135, %v1134
    %v1198 = vpack.c.bf16 %v1137, %v1136
    %v1199 = vpack.c.bf16 %v1139, %v1138
    %v1200 = vpack.c.bf16 %v1141, %v1140
    %v1201 = vpack.c.bf16 %v1143, %v1142
    %v1202 = vpack.c.bf16 %v1145, %v1144
    %v1203 = vpack.c.bf16 %v1147, %v1146
    %v1204 = vpack.c.bf16 %v1149, %v1148
    %v1205 = vpack.c.bf16 %v1151, %v1150
    %v1206 = vpack.c.bf16 %v1153, %v1152
    %v1207 = vpack.c.bf16 %v1155, %v1154
    %v1208 = vpack.c.bf16 %v1157, %v1156
    %v1209 = vpack.c.bf16 %v1159, %v1158
    %v1210 = vpack.c.bf16 %v1161, %v1160
    %v1211 = vpack.c.bf16 %v1163, %v1162
    %v1212 = vpack.c.bf16 %v1165, %v1164
    %v1213 = vpack.c.bf16 %v1167, %v1166
    %v1214 = vpack.c.bf16 %v1169, %v1168
    %v1215 = vpack.c.bf16 %v1171, %v1170
    %v1216 = vpack.c.bf16 %v1173, %v1172
    %v1217 = vpack.c.bf16 %v1175, %v1174
    %v1218 = vpack.c.bf16 %v1177, %v1176
    %v1219 = vpack.c.bf16 %v1179, %v1178
    %v1220 = vpack.c.bf16 %v1181, %v1180
    %v1221 = vpack.c.bf16 %v1183, %v1182
    %v1222 = vpack.c.bf16 %v1185, %v1184
    %v1223 = vpack.c.bf16 %v1187, %v1186
    %v1224 = vpack.c.bf16 %v1189, %v1188
    %v1225 = vpack.c.bf16 %v1191, %v1190
    %v1226 = vpack.c.bf16 %v1193, %v1192
    %v1227 = vpack.c.bf16 %v1195, %v1194
    %v1228 = vld [vmem:[%s3] sm:$0xf]
    %v1229 = vld [vmem:[%s3 + $0x4] sm:$0xf]
    %v1230 = vld [vmem:[%s3 + $0x8] sm:$0xf]
    %v1231 = vld [vmem:[%s3 + $0xc] sm:$0xf]
    %v1232 = vld [vmem:[%s3 + $0x10] sm:$0xf]
    %v1233 = vld [vmem:[%s3 + $0x14] sm:$0xf]
    %v1234 = vld [vmem:[%s3 + $0x18] sm:$0xf]
    %v1235 = vld [vmem:[%s3 + $0x1c] sm:$0xf]
    %v1236 = vld [vmem:[%s3 + $0x20] sm:$0xf]
    %v1237 = vld [vmem:[%s3 + $0x24] sm:$0xf]
    %v1238 = vld [vmem:[%s3 + $0x28] sm:$0xf]
    %v1239 = vld [vmem:[%s3 + $0x2c] sm:$0xf]
    %v1240 = vld [vmem:[%s3 + $0x30] sm:$0xf]
    %v1241 = vld [vmem:[%s3 + $0x34] sm:$0xf]
    %v1242 = vld [vmem:[%s3 + $0x38] sm:$0xf]
    %v1243 = vld [vmem:[%s3 + $0x3c] sm:$0xf]
    %v1244 = vld [vmem:[%s4] sm:$0x1]
    %v1246 = vlaneseq
    %v1247 = vshrl.u32 %v1246, 7
    %v1248 = vsub.s32 0, %v1247
    %v1249 = vrot.slane %v1244, %v1248
    %v1267 = vunpack.c.l.b16 %v1228
    %v1268 = vunpack.c.l.b16 %v1229
    %v1269 = vunpack.c.l.b16 %v1230
    %v1270 = vunpack.c.l.b16 %v1231
    %v1271 = vunpack.c.l.b16 %v1232
    %v1272 = vunpack.c.l.b16 %v1233
    %v1273 = vunpack.c.l.b16 %v1234
    %v1274 = vunpack.c.l.b16 %v1235
    %v1275 = vunpack.c.l.b16 %v1236
    %v1276 = vunpack.c.l.b16 %v1237
    %v1277 = vunpack.c.l.b16 %v1238
    %v1278 = vunpack.c.l.b16 %v1239
    %v1279 = vunpack.c.l.b16 %v1240
    %v1280 = vunpack.c.l.b16 %v1241
    %v1281 = vunpack.c.l.b16 %v1242
    %v1282 = vunpack.c.l.b16 %v1243
    %v1283 = vpack.c.b16 %v1268, %v1267
    %v1284 = vpack.c.b16 %v1270, %v1269
    %v1285 = vpack.c.b16 %v1272, %v1271
    %v1286 = vpack.c.b16 %v1274, %v1273
    %v1287 = vpack.c.b16 %v1276, %v1275
    %v1288 = vpack.c.b16 %v1278, %v1277
    %v1289 = vpack.c.b16 %v1280, %v1279
    %v1290 = vpack.c.b16 %v1282, %v1281
    %1299 = vmatprep.subr.bf16.mxu0 0
    %1300 = vmatpush1.bf16.msra.mxu0 %v1283
    %1301 = vmatprep.subr.bf16.mxu0 0
    %1302 = vmatpush1.bf16.msra.mxu0 %v1284
    %1303 = vmatprep.subr.bf16.mxu0 0
    %1304 = vmatpush1.bf16.msra.mxu0 %v1285
    %1305 = vmatprep.subr.bf16.mxu0 0
    %1306 = vmatpush1.bf16.msra.mxu0 %v1286
    %1307 = vmatprep.subr.bf16.mxu0 0
    %1308 = vmatpush1.bf16.msra.mxu0 %v1287
    %1309 = vmatprep.subr.bf16.mxu0 0
    %1310 = vmatpush1.bf16.msra.mxu0 %v1288
    %1311 = vmatprep.subr.bf16.mxu0 0
    %1312 = vmatpush1.bf16.msra.mxu0 %v1289
    %1313 = vmatprep.subr.bf16.mxu0 0
    %1314 = vmatpush1.bf16.msra.mxu0 %v1290
    %1315 = vmatprep.subr.bf16.mxu0 0
    %1316 = vmatpush1.bf16.msra.mxu0 0
    %1317 = vmatprep.subr.bf16.mxu0 0
    %1318 = vmatpush1.bf16.msra.mxu0 0
    %1319 = vmatprep.subr.bf16.mxu0 0
    %1320 = vmatpush1.bf16.msra.mxu0 0
    %1321 = vmatprep.subr.bf16.mxu0 0
    %1322 = vmatpush1.bf16.msra.mxu0 0
    %1323 = vmatprep.subr.bf16.mxu0 0
    %1324 = vmatpush1.bf16.msra.mxu0 0
    %1325 = vmatprep.subr.bf16.mxu0 0
    %1326 = vmatpush1.bf16.msra.mxu0 0
    %1327 = vmatprep.subr.bf16.mxu0 0
    %1328 = vmatpush1.bf16.msra.mxu0 0
    %1329 = vmatprep.subr.bf16.mxu0 0
    %1330 = vmatpush1.bf16.msra.mxu0 0
    %1331 = vmatprep.mubr.bf16.mxu0 0
    %1332 = vmatmul.mubr.bf16.gmra.mrb[0].mxu0 %v1196
    %v1333 = vpop.f32.mrb[0].mxu0
    %v1334 = vadd.f32 %v1249, %v1333
    %v1335 = vpop.f32.mrb[0].mxu0
    %v1336 = vpop.f32.mrb[0].mxu0
    %v1337 = vadd.f32 %v1249, %v1336
    %v1338 = vpop.f32.mrb[0].mxu0
    %1339 = vmatprep.mubr.bf16.mxu0 0
    %1340 = vmatmul.mubr.bf16.gmra.mrb[0].mxu0 %v1197
    %v1341 = vpop.f32.mrb[0].mxu0
    %v1342 = vadd.f32 %v1249, %v1341
    %v1343 = vpop.f32.mrb[0].mxu0
    %v1344 = vpop.f32.mrb[0].mxu0
    %v1345 = vadd.f32 %v1249, %v1344
    %v1346 = vpop.f32.mrb[0].mxu0
    %1347 = vmatprep.mubr.bf16.mxu0 0
    %1348 = vmatmul.mubr.bf16.gmra.mrb[0].mxu0 %v1198
    %v1349 = vpop.f32.mrb[0].mxu0
    %v1350 = vadd.f32 %v1249, %v1349
    %v1351 = vpop.f32.mrb[0].mxu0
    %v1352 = vpop.f32.mrb[0].mxu0
    %v1353 = vadd.f32 %v1249, %v1352
    %v1354 = vpop.f32.mrb[0].mxu0
    %1355 = vmatprep.mubr.bf16.mxu0 0
    %1356 = vmatmul.mubr.bf16.gmra.mrb[0].mxu0 %v1199
    %v1357 = vpop.f32.mrb[0].mxu0
    %v1358 = vadd.f32 %v1249, %v1357
    %v1359 = vpop.f32.mrb[0].mxu0
    %v1360 = vpop.f32.mrb[0].mxu0
    %v1361 = vadd.f32 %v1249, %v1360
    %v1362 = vpop.f32.mrb[0].mxu0
    %1363 = vmatprep.mubr.bf16.mxu0 0
    %1364 = vmatmul.mubr.bf16.gmra.mrb[0].mxu0 %v1200
    %v1365 = vpop.f32.mrb[0].mxu0
    %v1366 = vadd.f32 %v1249, %v1365
    %v1367 = vpop.f32.mrb[0].mxu0
    %v1368 = vpop.f32.mrb[0].mxu0
    %v1369 = vadd.f32 %v1249, %v1368
    %v1370 = vpop.f32.mrb[0].mxu0
    %1371 = vmatprep.mubr.bf16.mxu0 0
    %1372 = vmatmul.mubr.bf16.gmra.mrb[0].mxu0 %v1201
    %v1373 = vpop.f32.mrb[0].mxu0
    %v1374 = vadd.f32 %v1249, %v1373
    %v1375 = vpop.f32.mrb[0].mxu0
    %v1376 = vpop.f32.mrb[0].mxu0
    %v1377 = vadd.f32 %v1249, %v1376
    %v1378 = vpop.f32.mrb[0].mxu0
    %1379 = vmatprep.mubr.bf16.mxu0 0
    %1380 = vmatmul.mubr.bf16.gmra.mrb[0].mxu0 %v1202
    %v1381 = vpop.f32.mrb[0].mxu0
    %v1382 = vadd.f32 %v1249, %v1381
    %v1383 = vpop.f32.mrb[0].mxu0
    %v1384 = vpop.f32.mrb[0].mxu0
    %v1385 = vadd.f32 %v1249, %v1384
    %v1386 = vpop.f32.mrb[0].mxu0
    %1387 = vmatprep.mubr.bf16.mxu0 0
    %1388 = vmatmul.mubr.bf16.gmra.mrb[0].mxu0 %v1203
    %v1389 = vpop.f32.mrb[0].mxu0
    %v1390 = vadd.f32 %v1249, %v1389
    %v1391 = vpop.f32.mrb[0].mxu0
    %v1392 = vpop.f32.mrb[0].mxu0
    %v1393 = vadd.f32 %v1249, %v1392
    %v1394 = vpop.f32.mrb[0].mxu0
    %1395 = vmatprep.mubr.bf16.mxu0 0
    %1396 = vmatmul.mubr.bf16.gmra.mrb[0].mxu0 %v1204
    %v1397 = vpop.f32.mrb[0].mxu0
    %v1398 = vadd.f32 %v1249, %v1397
    %v1399 = vpop.f32.mrb[0].mxu0
    %v1400 = vpop.f32.mrb[0].mxu0
    %v1401 = vadd.f32 %v1249, %v1400
    %v1402 = vpop.f32.mrb[0].mxu0
    %1403 = vmatprep.mubr.bf16.mxu0 0
    %1404 = vmatmul.mubr.bf16.gmra.mrb[0].mxu0 %v1205
    %v1405 = vpop.f32.mrb[0].mxu0
    %v1406 = vadd.f32 %v1249, %v1405
    %v1407 = vpop.f32.mrb[0].mxu0
    %v1408 = vpop.f32.mrb[0].mxu0
    %v1409 = vadd.f32 %v1249, %v1408
    %v1410 = vpop.f32.mrb[0].mxu0
    %1411 = vmatprep.mubr.bf16.mxu0 0
    %1412 = vmatmul.mubr.bf16.gmra.mrb[0].mxu0 %v1206
    %v1413 = vpop.f32.mrb[0].mxu0
    %v1414 = vadd.f32 %v1249, %v1413
    %v1415 = vpop.f32.mrb[0].mxu0
    %v1416 = vpop.f32.mrb[0].mxu0
    %v1417 = vadd.f32 %v1249, %v1416
    %v1418 = vpop.f32.mrb[0].mxu0
    %1419 = vmatprep.mubr.bf16.mxu0 0
    %1420 = vmatmul.mubr.bf16.gmra.mrb[0].mxu0 %v1207
    %v1421 = vpop.f32.mrb[0].mxu0
    %v1422 = vadd.f32 %v1249, %v1421
    %v1423 = vpop.f32.mrb[0].mxu0
    %v1424 = vpop.f32.mrb[0].mxu0
    %v1425 = vadd.f32 %v1249, %v1424
    %v1426 = vpop.f32.mrb[0].mxu0
    %1427 = vmatprep.mubr.bf16.mxu0 0
    %1428 = vmatmul.mubr.bf16.gmra.mrb[0].mxu0 %v1208
    %v1429 = vpop.f32.mrb[0].mxu0
    %v1430 = vadd.f32 %v1249, %v1429
    %v1431 = vpop.f32.mrb[0].mxu0
    %v1432 = vpop.f32.mrb[0].mxu0
    %v1433 = vadd.f32 %v1249, %v1432
    %v1434 = vpop.f32.mrb[0].mxu0
    %1435 = vmatprep.mubr.bf16.mxu0 0
    %1436 = vmatmul.mubr.bf16.gmra.mrb[0].mxu0 %v1209
    %v1437 = vpop.f32.mrb[0].mxu0
    %v1438 = vadd.f32 %v1249, %v1437
    %v1439 = vpop.f32.mrb[0].mxu0
    %v1440 = vpop.f32.mrb[0].mxu0
    %v1441 = vadd.f32 %v1249, %v1440
    %v1442 = vpop.f32.mrb[0].mxu0
    %1443 = vmatprep.mubr.bf16.mxu0 0
    %1444 = vmatmul.mubr.bf16.gmra.mrb[0].mxu0 %v1210
    %v1445 = vpop.f32.mrb[0].mxu0
    %v1446 = vadd.f32 %v1249, %v1445
    %v1447 = vpop.f32.mrb[0].mxu0
    %v1448 = vpop.f32.mrb[0].mxu0
    %v1449 = vadd.f32 %v1249, %v1448
    %v1450 = vpop.f32.mrb[0].mxu0
    %1451 = vmatprep.mubr.bf16.mxu0 0
    %1452 = vmatmul.mubr.bf16.gmra.mrb[0].mxu0 %v1211
    %v1453 = vpop.f32.mrb[0].mxu0
    %v1454 = vadd.f32 %v1249, %v1453
    %v1455 = vpop.f32.mrb[0].mxu0
    %v1456 = vpop.f32.mrb[0].mxu0
    %v1457 = vadd.f32 %v1249, %v1456
    %v1458 = vpop.f32.mrb[0].mxu0
    %1459 = vmatprep.mubr.bf16.mxu0 0
    %1460 = vmatmul.mubr.bf16.gmra.mrb[0].mxu0 %v1212
    %v1461 = vpop.f32.mrb[0].mxu0
    %v1462 = vadd.f32 %v1249, %v1461
    %v1463 = vpop.f32.mrb[0].mxu0
    %v1464 = vpop.f32.mrb[0].mxu0
    %v1465 = vadd.f32 %v1249, %v1464
    %v1466 = vpop.f32.mrb[0].mxu0
    %1467 = vmatprep.mubr.bf16.mxu0 0
    %1468 = vmatmul.mubr.bf16.gmra.mrb[0].mxu0 %v1213
    %v1469 = vpop.f32.mrb[0].mxu0
    %v1470 = vadd.f32 %v1249, %v1469
    %v1471 = vpop.f32.mrb[0].mxu0
    %v1472 = vpop.f32.mrb[0].mxu0
    %v1473 = vadd.f32 %v1249, %v1472
    %v1474 = vpop.f32.mrb[0].mxu0
    %1475 = vmatprep.mubr.bf16.mxu0 0
    %1476 = vmatmul.mubr.bf16.gmra.mrb[0].mxu0 %v1214
    %v1477 = vpop.f32.mrb[0].mxu0
    %v1478 = vadd.f32 %v1249, %v1477
    %v1479 = vpop.f32.mrb[0].mxu0
    %v1480 = vpop.f32.mrb[0].mxu0
    %v1481 = vadd.f32 %v1249, %v1480
    %v1482 = vpop.f32.mrb[0].mxu0
    %1483 = vmatprep.mubr.bf16.mxu0 0
    %1484 = vmatmul.mubr.bf16.gmra.mrb[0].mxu0 %v1215
    %v1485 = vpop.f32.mrb[0].mxu0
    %v1486 = vadd.f32 %v1249, %v1485
    %v1487 = vpop.f32.mrb[0].mxu0
    %v1488 = vpop.f32.mrb[0].mxu0
    %v1489 = vadd.f32 %v1249, %v1488
    %v1490 = vpop.f32.mrb[0].mxu0
    %1491 = vmatprep.mubr.bf16.mxu0 0
    %1492 = vmatmul.mubr.bf16.gmra.mrb[0].mxu0 %v1216
    %v1493 = vpop.f32.mrb[0].mxu0
    %v1494 = vadd.f32 %v1249, %v1493
    %v1495 = vpop.f32.mrb[0].mxu0
    %v1496 = vpop.f32.mrb[0].mxu0
    %v1497 = vadd.f32 %v1249, %v1496
    %v1498 = vpop.f32.mrb[0].mxu0
    %1499 = vmatprep.mubr.bf16.mxu0 0
    %1500 = vmatmul.mubr.bf16.gmra.mrb[0].mxu0 %v1217
    %v1501 = vpop.f32.mrb[0].mxu0
    %v1502 = vadd.f32 %v1249, %v1501
    %v1503 = vpop.f32.mrb[0].mxu0
    %v1504 = vpop.f32.mrb[0].mxu0
    %v1505 = vadd.f32 %v1249, %v1504
    %v1506 = vpop.f32.mrb[0].mxu0
    %1507 = vmatprep.mubr.bf16.mxu0 0
    %1508 = vmatmul.mubr.bf16.gmra.mrb[0].mxu0 %v1218
    %v1509 = vpop.f32.mrb[0].mxu0
    %v1510 = vadd.f32 %v1249, %v1509
    %v1511 = vpop.f32.mrb[0].mxu0
    %v1512 = vpop.f32.mrb[0].mxu0
    %v1513 = vadd.f32 %v1249, %v1512
    %v1514 = vpop.f32.mrb[0].mxu0
    %1515 = vmatprep.mubr.bf16.mxu0 0
    %1516 = vmatmul.mubr.bf16.gmra.mrb[0].mxu0 %v1219
    %v1517 = vpop.f32.mrb[0].mxu0
    %v1518 = vadd.f32 %v1249, %v1517
    %v1519 = vpop.f32.mrb[0].mxu0
    %v1520 = vpop.f32.mrb[0].mxu0
    %v1521 = vadd.f32 %v1249, %v1520
    %v1522 = vpop.f32.mrb[0].mxu0
    %1523 = vmatprep.mubr.bf16.mxu0 0
    %1524 = vmatmul.mubr.bf16.gmra.mrb[0].mxu0 %v1220
    %v1525 = vpop.f32.mrb[0].mxu0
    %v1526 = vadd.f32 %v1249, %v1525
    %v1527 = vpop.f32.mrb[0].mxu0
    %v1528 = vpop.f32.mrb[0].mxu0
    %v1529 = vadd.f32 %v1249, %v1528
    %v1530 = vpop.f32.mrb[0].mxu0
    %1531 = vmatprep.mubr.bf16.mxu0 0
    %1532 = vmatmul.mubr.bf16.gmra.mrb[0].mxu0 %v1221
    %v1533 = vpop.f32.mrb[0].mxu0
    %v1534 = vadd.f32 %v1249, %v1533
    %v1535 = vpop.f32.mrb[0].mxu0
    %v1536 = vpop.f32.mrb[0].mxu0
    %v1537 = vadd.f32 %v1249, %v1536
    %v1538 = vpop.f32.mrb[0].mxu0
    %1539 = vmatprep.mubr.bf16.mxu0 0
    %1540 = vmatmul.mubr.bf16.gmra.mrb[0].mxu0 %v1222
    %v1541 = vpop.f32.mrb[0].mxu0
    %v1542 = vadd.f32 %v1249, %v1541
    %v1543 = vpop.f32.mrb[0].mxu0
    %v1544 = vpop.f32.mrb[0].mxu0
    %v1545 = vadd.f32 %v1249, %v1544
    %v1546 = vpop.f32.mrb[0].mxu0
    %1547 = vmatprep.mubr.bf16.mxu0 0
    %1548 = vmatmul.mubr.bf16.gmra.mrb[0].mxu0 %v1223
    %v1549 = vpop.f32.mrb[0].mxu0
    %v1550 = vadd.f32 %v1249, %v1549
    %v1551 = vpop.f32.mrb[0].mxu0
    %v1552 = vpop.f32.mrb[0].mxu0
    %v1553 = vadd.f32 %v1249, %v1552
    %v1554 = vpop.f32.mrb[0].mxu0
    %1555 = vmatprep.mubr.bf16.mxu0 0
    %1556 = vmatmul.mubr.bf16.gmra.mrb[0].mxu0 %v1224
    %v1557 = vpop.f32.mrb[0].mxu0
    %v1558 = vadd.f32 %v1249, %v1557
    %v1559 = vpop.f32.mrb[0].mxu0
    %v1560 = vpop.f32.mrb[0].mxu0
    %v1561 = vadd.f32 %v1249, %v1560
    %v1562 = vpop.f32.mrb[0].mxu0
    %1563 = vmatprep.mubr.bf16.mxu0 0
    %1564 = vmatmul.mubr.bf16.gmra.mrb[0].mxu0 %v1225
    %v1565 = vpop.f32.mrb[0].mxu0
    %v1566 = vadd.f32 %v1249, %v1565
    %v1567 = vpop.f32.mrb[0].mxu0
    %v1568 = vpop.f32.mrb[0].mxu0
    %v1569 = vadd.f32 %v1249, %v1568
    %v1570 = vpop.f32.mrb[0].mxu0
    %1571 = vmatprep.mubr.bf16.mxu0 0
    %1572 = vmatmul.mubr.bf16.gmra.mrb[0].mxu0 %v1226
    %v1573 = vpop.f32.mrb[0].mxu0
    %v1574 = vadd.f32 %v1249, %v1573
    %v1575 = vpop.f32.mrb[0].mxu0
    %v1576 = vpop.f32.mrb[0].mxu0
    %v1577 = vadd.f32 %v1249, %v1576
    %v1578 = vpop.f32.mrb[0].mxu0
    %1579 = vmatprep.mubr.bf16.mxu0 0
    %1580 = vmatmul.mubr.bf16.gmra.mrb[0].mxu0 %v1227
    %v1581 = vpop.f32.mrb[0].mxu0
    %v1582 = vadd.f32 %v1249, %v1581
    %v1583 = vpop.f32.mrb[0].mxu0
    %v1584 = vpop.f32.mrb[0].mxu0
    %v1585 = vadd.f32 %v1249, %v1584
    %v1586 = vpop.f32.mrb[0].mxu0
    %1587 = vdwg.mxu0
    %v1588 = vrot.slane %v1334, 4
    %v1589 = vmax.f32 %v1334, %v1588
    %v1590 = vrot.slane %v1589, 2
    %v1591 = vmax.f32 %v1589, %v1590
    %v1592 = vrot.slane %v1591, 1
    %v1593 = vmax.f32 %v1591, %v1592
    %v1594 = vrot.slane %v1337, 4
    %v1595 = vmax.f32 %v1337, %v1594
    %v1596 = vrot.slane %v1595, 2
    %v1597 = vmax.f32 %v1595, %v1596
    %v1598 = vrot.slane %v1597, 1
    %v1599 = vmax.f32 %v1597, %v1598
    %v1600 = vrot.slane %v1342, 4
    %v1601 = vmax.f32 %v1342, %v1600
    %v1602 = vrot.slane %v1601, 2
    %v1603 = vmax.f32 %v1601, %v1602
    %v1604 = vrot.slane %v1603, 1
    %v1605 = vmax.f32 %v1603, %v1604
    %v1606 = vrot.slane %v1345, 4
    %v1607 = vmax.f32 %v1345, %v1606
    %v1608 = vrot.slane %v1607, 2
    %v1609 = vmax.f32 %v1607, %v1608
    %v1610 = vrot.slane %v1609, 1
    %v1611 = vmax.f32 %v1609, %v1610
    %v1612 = vrot.slane %v1350, 4
    %v1613 = vmax.f32 %v1350, %v1612
    %v1614 = vrot.slane %v1613, 2
    %v1615 = vmax.f32 %v1613, %v1614
    %v1616 = vrot.slane %v1615, 1
    %v1617 = vmax.f32 %v1615, %v1616
    %v1618 = vrot.slane %v1353, 4
    %v1619 = vmax.f32 %v1353, %v1618
    %v1620 = vrot.slane %v1619, 2
    %v1621 = vmax.f32 %v1619, %v1620
    %v1622 = vrot.slane %v1621, 1
    %v1623 = vmax.f32 %v1621, %v1622
    %v1624 = vrot.slane %v1358, 4
    %v1625 = vmax.f32 %v1358, %v1624
    %v1626 = vrot.slane %v1625, 2
    %v1627 = vmax.f32 %v1625, %v1626
    %v1628 = vrot.slane %v1627, 1
    %v1629 = vmax.f32 %v1627, %v1628
    %v1630 = vrot.slane %v1361, 4
    %v1631 = vmax.f32 %v1361, %v1630
    %v1632 = vrot.slane %v1631, 2
    %v1633 = vmax.f32 %v1631, %v1632
    %v1634 = vrot.slane %v1633, 1
    %v1635 = vmax.f32 %v1633, %v1634
    %v1636 = vrot.slane %v1366, 4
    %v1637 = vmax.f32 %v1366, %v1636
    %v1638 = vrot.slane %v1637, 2
    %v1639 = vmax.f32 %v1637, %v1638
    %v1640 = vrot.slane %v1639, 1
    %v1641 = vmax.f32 %v1639, %v1640
    %v1642 = vrot.slane %v1369, 4
    %v1643 = vmax.f32 %v1369, %v1642
    %v1644 = vrot.slane %v1643, 2
    %v1645 = vmax.f32 %v1643, %v1644
    %v1646 = vrot.slane %v1645, 1
    %v1647 = vmax.f32 %v1645, %v1646
    %v1648 = vrot.slane %v1374, 4
    %v1649 = vmax.f32 %v1374, %v1648
    %v1650 = vrot.slane %v1649, 2
    %v1651 = vmax.f32 %v1649, %v1650
    %v1652 = vrot.slane %v1651, 1
    %v1653 = vmax.f32 %v1651, %v1652
    %v1654 = vrot.slane %v1377, 4
    %v1655 = vmax.f32 %v1377, %v1654
    %v1656 = vrot.slane %v1655, 2
    %v1657 = vmax.f32 %v1655, %v1656
    %v1658 = vrot.slane %v1657, 1
    %v1659 = vmax.f32 %v1657, %v1658
    %v1660 = vrot.slane %v1382, 4
    %v1661 = vmax.f32 %v1382, %v1660
    %v1662 = vrot.slane %v1661, 2
    %v1663 = vmax.f32 %v1661, %v1662
    %v1664 = vrot.slane %v1663, 1
    %v1665 = vmax.f32 %v1663, %v1664
    %v1666 = vrot.slane %v1385, 4
    %v1667 = vmax.f32 %v1385, %v1666
    %v1668 = vrot.slane %v1667, 2
    %v1669 = vmax.f32 %v1667, %v1668
    %v1670 = vrot.slane %v1669, 1
    %v1671 = vmax.f32 %v1669, %v1670
    %v1672 = vrot.slane %v1390, 4
    %v1673 = vmax.f32 %v1390, %v1672
    %v1674 = vrot.slane %v1673, 2
    %v1675 = vmax.f32 %v1673, %v1674
    %v1676 = vrot.slane %v1675, 1
    %v1677 = vmax.f32 %v1675, %v1676
    %v1678 = vrot.slane %v1393, 4
    %v1679 = vmax.f32 %v1393, %v1678
    %v1680 = vrot.slane %v1679, 2
    %v1681 = vmax.f32 %v1679, %v1680
    %v1682 = vrot.slane %v1681, 1
    %v1683 = vmax.f32 %v1681, %v1682
    %v1684 = vrot.slane %v1398, 4
    %v1685 = vmax.f32 %v1398, %v1684
    %v1686 = vrot.slane %v1685, 2
    %v1687 = vmax.f32 %v1685, %v1686
    %v1688 = vrot.slane %v1687, 1
    %v1689 = vmax.f32 %v1687, %v1688
    %v1690 = vrot.slane %v1401, 4
    %v1691 = vmax.f32 %v1401, %v1690
    %v1692 = vrot.slane %v1691, 2
    %v1693 = vmax.f32 %v1691, %v1692
    %v1694 = vrot.slane %v1693, 1
    %v1695 = vmax.f32 %v1693, %v1694
    %v1696 = vrot.slane %v1406, 4
    %v1697 = vmax.f32 %v1406, %v1696
    %v1698 = vrot.slane %v1697, 2
    %v1699 = vmax.f32 %v1697, %v1698
    %v1700 = vrot.slane %v1699, 1
    %v1701 = vmax.f32 %v1699, %v1700
    %v1702 = vrot.slane %v1409, 4
    %v1703 = vmax.f32 %v1409, %v1702
    %v1704 = vrot.slane %v1703, 2
    %v1705 = vmax.f32 %v1703, %v1704
    %v1706 = vrot.slane %v1705, 1
    %v1707 = vmax.f32 %v1705, %v1706
    %v1708 = vrot.slane %v1414, 4
    %v1709 = vmax.f32 %v1414, %v1708
    %v1710 = vrot.slane %v1709, 2
    %v1711 = vmax.f32 %v1709, %v1710
    %v1712 = vrot.slane %v1711, 1
    %v1713 = vmax.f32 %v1711, %v1712
    %v1714 = vrot.slane %v1417, 4
    %v1715 = vmax.f32 %v1417, %v1714
    %v1716 = vrot.slane %v1715, 2
    %v1717 = vmax.f32 %v1715, %v1716
    %v1718 = vrot.slane %v1717, 1
    %v1719 = vmax.f32 %v1717, %v1718
    %v1720 = vrot.slane %v1422, 4
    %v1721 = vmax.f32 %v1422, %v1720
    %v1722 = vrot.slane %v1721, 2
    %v1723 = vmax.f32 %v1721, %v1722
    %v1724 = vrot.slane %v1723, 1
    %v1725 = vmax.f32 %v1723, %v1724
    %v1726 = vrot.slane %v1425, 4
    %v1727 = vmax.f32 %v1425, %v1726
    %v1728 = vrot.slane %v1727, 2
    %v1729 = vmax.f32 %v1727, %v1728
    %v1730 = vrot.slane %v1729, 1
    %v1731 = vmax.f32 %v1729, %v1730
    %v1732 = vrot.slane %v1430, 4
    %v1733 = vmax.f32 %v1430, %v1732
    %v1734 = vrot.slane %v1733, 2
    %v1735 = vmax.f32 %v1733, %v1734
    %v1736 = vrot.slane %v1735, 1
    %v1737 = vmax.f32 %v1735, %v1736
    %v1738 = vrot.slane %v1433, 4
    %v1739 = vmax.f32 %v1433, %v1738
    %v1740 = vrot.slane %v1739, 2
    %v1741 = vmax.f32 %v1739, %v1740
    %v1742 = vrot.slane %v1741, 1
    %v1743 = vmax.f32 %v1741, %v1742
    %v1744 = vrot.slane %v1438, 4
    %v1745 = vmax.f32 %v1438, %v1744
    %v1746 = vrot.slane %v1745, 2
    %v1747 = vmax.f32 %v1745, %v1746
    %v1748 = vrot.slane %v1747, 1
    %v1749 = vmax.f32 %v1747, %v1748
    %v1750 = vrot.slane %v1441, 4
    %v1751 = vmax.f32 %v1441, %v1750
    %v1752 = vrot.slane %v1751, 2
    %v1753 = vmax.f32 %v1751, %v1752
    %v1754 = vrot.slane %v1753, 1
    %v1755 = vmax.f32 %v1753, %v1754
    %v1756 = vrot.slane %v1446, 4
    %v1757 = vmax.f32 %v1446, %v1756
    %v1758 = vrot.slane %v1757, 2
    %v1759 = vmax.f32 %v1757, %v1758
    %v1760 = vrot.slane %v1759, 1
    %v1761 = vmax.f32 %v1759, %v1760
    %v1762 = vrot.slane %v1449, 4
    %v1763 = vmax.f32 %v1449, %v1762
    %v1764 = vrot.slane %v1763, 2
    %v1765 = vmax.f32 %v1763, %v1764
    %v1766 = vrot.slane %v1765, 1
    %v1767 = vmax.f32 %v1765, %v1766
    %v1768 = vrot.slane %v1454, 4
    %v1769 = vmax.f32 %v1454, %v1768
    %v1770 = vrot.slane %v1769, 2
    %v1771 = vmax.f32 %v1769, %v1770
    %v1772 = vrot.slane %v1771, 1
    %v1773 = vmax.f32 %v1771, %v1772
    %v1774 = vrot.slane %v1457, 4
    %v1775 = vmax.f32 %v1457, %v1774
    %v1776 = vrot.slane %v1775, 2
    %v1777 = vmax.f32 %v1775, %v1776
    %v1778 = vrot.slane %v1777, 1
    %v1779 = vmax.f32 %v1777, %v1778
    %v1780 = vrot.slane %v1462, 4
    %v1781 = vmax.f32 %v1462, %v1780
    %v1782 = vrot.slane %v1781, 2
    %v1783 = vmax.f32 %v1781, %v1782
    %v1784 = vrot.slane %v1783, 1
    %v1785 = vmax.f32 %v1783, %v1784
    %v1786 = vrot.slane %v1465, 4
    %v1787 = vmax.f32 %v1465, %v1786
    %v1788 = vrot.slane %v1787, 2
    %v1789 = vmax.f32 %v1787, %v1788
    %v1790 = vrot.slane %v1789, 1
    %v1791 = vmax.f32 %v1789, %v1790
    %v1792 = vrot.slane %v1470, 4
    %v1793 = vmax.f32 %v1470, %v1792
    %v1794 = vrot.slane %v1793, 2
    %v1795 = vmax.f32 %v1793, %v1794
    %v1796 = vrot.slane %v1795, 1
    %v1797 = vmax.f32 %v1795, %v1796
    %v1798 = vrot.slane %v1473, 4
    %v1799 = vmax.f32 %v1473, %v1798
    %v1800 = vrot.slane %v1799, 2
    %v1801 = vmax.f32 %v1799, %v1800
    %v1802 = vrot.slane %v1801, 1
    %v1803 = vmax.f32 %v1801, %v1802
    %v1804 = vrot.slane %v1478, 4
    %v1805 = vmax.f32 %v1478, %v1804
    %v1806 = vrot.slane %v1805, 2
    %v1807 = vmax.f32 %v1805, %v1806
    %v1808 = vrot.slane %v1807, 1
    %v1809 = vmax.f32 %v1807, %v1808
    %v1810 = vrot.slane %v1481, 4
    %v1811 = vmax.f32 %v1481, %v1810
    %v1812 = vrot.slane %v1811, 2
    %v1813 = vmax.f32 %v1811, %v1812
    %v1814 = vrot.slane %v1813, 1
    %v1815 = vmax.f32 %v1813, %v1814
    %v1816 = vrot.slane %v1486, 4
    %v1817 = vmax.f32 %v1486, %v1816
    %v1818 = vrot.slane %v1817, 2
    %v1819 = vmax.f32 %v1817, %v1818
    %v1820 = vrot.slane %v1819, 1
    %v1821 = vmax.f32 %v1819, %v1820
    %v1822 = vrot.slane %v1489, 4
    %v1823 = vmax.f32 %v1489, %v1822
    %v1824 = vrot.slane %v1823, 2
    %v1825 = vmax.f32 %v1823, %v1824
    %v1826 = vrot.slane %v1825, 1
    %v1827 = vmax.f32 %v1825, %v1826
    %v1828 = vrot.slane %v1494, 4
    %v1829 = vmax.f32 %v1494, %v1828
    %v1830 = vrot.slane %v1829, 2
    %v1831 = vmax.f32 %v1829, %v1830
    %v1832 = vrot.slane %v1831, 1
    %v1833 = vmax.f32 %v1831, %v1832
    %v1834 = vrot.slane %v1497, 4
    %v1835 = vmax.f32 %v1497, %v1834
    %v1836 = vrot.slane %v1835, 2
    %v1837 = vmax.f32 %v1835, %v1836
    %v1838 = vrot.slane %v1837, 1
    %v1839 = vmax.f32 %v1837, %v1838
    %v1840 = vrot.slane %v1502, 4
    %v1841 = vmax.f32 %v1502, %v1840
    %v1842 = vrot.slane %v1841, 2
    %v1843 = vmax.f32 %v1841, %v1842
    %v1844 = vrot.slane %v1843, 1
    %v1845 = vmax.f32 %v1843, %v1844
    %v1846 = vrot.slane %v1505, 4
    %v1847 = vmax.f32 %v1505, %v1846
    %v1848 = vrot.slane %v1847, 2
    %v1849 = vmax.f32 %v1847, %v1848
    %v1850 = vrot.slane %v1849, 1
    %v1851 = vmax.f32 %v1849, %v1850
    %v1852 = vrot.slane %v1510, 4
    %v1853 = vmax.f32 %v1510, %v1852
    %v1854 = vrot.slane %v1853, 2
    %v1855 = vmax.f32 %v1853, %v1854
    %v1856 = vrot.slane %v1855, 1
    %v1857 = vmax.f32 %v1855, %v1856
    %v1858 = vrot.slane %v1513, 4
    %v1859 = vmax.f32 %v1513, %v1858
    %v1860 = vrot.slane %v1859, 2
    %v1861 = vmax.f32 %v1859, %v1860
    %v1862 = vrot.slane %v1861, 1
    %v1863 = vmax.f32 %v1861, %v1862
    %v1864 = vrot.slane %v1518, 4
    %v1865 = vmax.f32 %v1518, %v1864
    %v1866 = vrot.slane %v1865, 2
    %v1867 = vmax.f32 %v1865, %v1866
    %v1868 = vrot.slane %v1867, 1
    %v1869 = vmax.f32 %v1867, %v1868
    %v1870 = vrot.slane %v1521, 4
    %v1871 = vmax.f32 %v1521, %v1870
    %v1872 = vrot.slane %v1871, 2
    %v1873 = vmax.f32 %v1871, %v1872
    %v1874 = vrot.slane %v1873, 1
    %v1875 = vmax.f32 %v1873, %v1874
    %v1876 = vrot.slane %v1526, 4
    %v1877 = vmax.f32 %v1526, %v1876
    %v1878 = vrot.slane %v1877, 2
    %v1879 = vmax.f32 %v1877, %v1878
    %v1880 = vrot.slane %v1879, 1
    %v1881 = vmax.f32 %v1879, %v1880
    %v1882 = vrot.slane %v1529, 4
    %v1883 = vmax.f32 %v1529, %v1882
    %v1884 = vrot.slane %v1883, 2
    %v1885 = vmax.f32 %v1883, %v1884
    %v1886 = vrot.slane %v1885, 1
    %v1887 = vmax.f32 %v1885, %v1886
    %v1888 = vrot.slane %v1534, 4
    %v1889 = vmax.f32 %v1534, %v1888
    %v1890 = vrot.slane %v1889, 2
    %v1891 = vmax.f32 %v1889, %v1890
    %v1892 = vrot.slane %v1891, 1
    %v1893 = vmax.f32 %v1891, %v1892
    %v1894 = vrot.slane %v1537, 4
    %v1895 = vmax.f32 %v1537, %v1894
    %v1896 = vrot.slane %v1895, 2
    %v1897 = vmax.f32 %v1895, %v1896
    %v1898 = vrot.slane %v1897, 1
    %v1899 = vmax.f32 %v1897, %v1898
    %v1900 = vrot.slane %v1542, 4
    %v1901 = vmax.f32 %v1542, %v1900
    %v1902 = vrot.slane %v1901, 2
    %v1903 = vmax.f32 %v1901, %v1902
    %v1904 = vrot.slane %v1903, 1
    %v1905 = vmax.f32 %v1903, %v1904
    %v1906 = vrot.slane %v1545, 4
    %v1907 = vmax.f32 %v1545, %v1906
    %v1908 = vrot.slane %v1907, 2
    %v1909 = vmax.f32 %v1907, %v1908
    %v1910 = vrot.slane %v1909, 1
    %v1911 = vmax.f32 %v1909, %v1910
    %v1912 = vrot.slane %v1550, 4
    %v1913 = vmax.f32 %v1550, %v1912
    %v1914 = vrot.slane %v1913, 2
    %v1915 = vmax.f32 %v1913, %v1914
    %v1916 = vrot.slane %v1915, 1
    %v1917 = vmax.f32 %v1915, %v1916
    %v1918 = vrot.slane %v1553, 4
    %v1919 = vmax.f32 %v1553, %v1918
    %v1920 = vrot.slane %v1919, 2
    %v1921 = vmax.f32 %v1919, %v1920
    %v1922 = vrot.slane %v1921, 1
    %v1923 = vmax.f32 %v1921, %v1922
    %v1924 = vrot.slane %v1558, 4
    %v1925 = vmax.f32 %v1558, %v1924
    %v1926 = vrot.slane %v1925, 2
    %v1927 = vmax.f32 %v1925, %v1926
    %v1928 = vrot.slane %v1927, 1
    %v1929 = vmax.f32 %v1927, %v1928
    %v1930 = vrot.slane %v1561, 4
    %v1931 = vmax.f32 %v1561, %v1930
    %v1932 = vrot.slane %v1931, 2
    %v1933 = vmax.f32 %v1931, %v1932
    %v1934 = vrot.slane %v1933, 1
    %v1935 = vmax.f32 %v1933, %v1934
    %v1936 = vrot.slane %v1566, 4
    %v1937 = vmax.f32 %v1566, %v1936
    %v1938 = vrot.slane %v1937, 2
    %v1939 = vmax.f32 %v1937, %v1938
    %v1940 = vrot.slane %v1939, 1
    %v1941 = vmax.f32 %v1939, %v1940
    %v1942 = vrot.slane %v1569, 4
    %v1943 = vmax.f32 %v1569, %v1942
    %v1944 = vrot.slane %v1943, 2
    %v1945 = vmax.f32 %v1943, %v1944
    %v1946 = vrot.slane %v1945, 1
    %v1947 = vmax.f32 %v1945, %v1946
    %v1948 = vrot.slane %v1574, 4
    %v1949 = vmax.f32 %v1574, %v1948
    %v1950 = vrot.slane %v1949, 2
    %v1951 = vmax.f32 %v1949, %v1950
    %v1952 = vrot.slane %v1951, 1
    %v1953 = vmax.f32 %v1951, %v1952
    %v1954 = vrot.slane %v1577, 4
    %v1955 = vmax.f32 %v1577, %v1954
    %v1956 = vrot.slane %v1955, 2
    %v1957 = vmax.f32 %v1955, %v1956
    %v1958 = vrot.slane %v1957, 1
    %v1959 = vmax.f32 %v1957, %v1958
    %v1960 = vrot.slane %v1582, 4
    %v1961 = vmax.f32 %v1582, %v1960
    %v1962 = vrot.slane %v1961, 2
    %v1963 = vmax.f32 %v1961, %v1962
    %v1964 = vrot.slane %v1963, 1
    %v1965 = vmax.f32 %v1963, %v1964
    %v1966 = vrot.slane %v1585, 4
    %v1967 = vmax.f32 %v1585, %v1966
    %v1968 = vrot.slane %v1967, 2
    %v1969 = vmax.f32 %v1967, %v1968
    %v1970 = vrot.slane %v1969, 1
    %v1971 = vmax.f32 %v1969, %v1970
    %v1972 = vpack.c.bf16 %v1593, %v1593
    %v1973 = vpack.c.bf16 %v1599, %v1599
    %v1974 = vpack.c.bf16 %v1605, %v1605
    %v1975 = vpack.c.bf16 %v1611, %v1611
    %v1976 = vpack.c.bf16 %v1617, %v1617
    %v1977 = vpack.c.bf16 %v1623, %v1623
    %v1978 = vpack.c.bf16 %v1629, %v1629
    %v1979 = vpack.c.bf16 %v1635, %v1635
    %v1980 = vpack.c.bf16 %v1641, %v1641
    %v1981 = vpack.c.bf16 %v1647, %v1647
    %v1982 = vpack.c.bf16 %v1653, %v1653
    %v1983 = vpack.c.bf16 %v1659, %v1659
    %v1984 = vpack.c.bf16 %v1665, %v1665
    %v1985 = vpack.c.bf16 %v1671, %v1671
    %v1986 = vpack.c.bf16 %v1677, %v1677
    %v1987 = vpack.c.bf16 %v1683, %v1683
    %v1988 = vpack.c.bf16 %v1689, %v1689
    %v1989 = vpack.c.bf16 %v1695, %v1695
    %v1990 = vpack.c.bf16 %v1701, %v1701
    %v1991 = vpack.c.bf16 %v1707, %v1707
    %v1992 = vpack.c.bf16 %v1713, %v1713
    %v1993 = vpack.c.bf16 %v1719, %v1719
    %v1994 = vpack.c.bf16 %v1725, %v1725
    %v1995 = vpack.c.bf16 %v1731, %v1731
    %v1996 = vpack.c.bf16 %v1737, %v1737
    %v1997 = vpack.c.bf16 %v1743, %v1743
    %v1998 = vpack.c.bf16 %v1749, %v1749
    %v1999 = vpack.c.bf16 %v1755, %v1755
    %v2000 = vpack.c.bf16 %v1761, %v1761
    %v2001 = vpack.c.bf16 %v1767, %v1767
    %v2002 = vpack.c.bf16 %v1773, %v1773
    %v2003 = vpack.c.bf16 %v1779, %v1779
    %v2004 = vpack.c.bf16 %v1785, %v1785
    %v2005 = vpack.c.bf16 %v1791, %v1791
    %v2006 = vpack.c.bf16 %v1797, %v1797
    %v2007 = vpack.c.bf16 %v1803, %v1803
    %v2008 = vpack.c.bf16 %v1809, %v1809
    %v2009 = vpack.c.bf16 %v1815, %v1815
    %v2010 = vpack.c.bf16 %v1821, %v1821
    %v2011 = vpack.c.bf16 %v1827, %v1827
    %v2012 = vpack.c.bf16 %v1833, %v1833
    %v2013 = vpack.c.bf16 %v1839, %v1839
    %v2014 = vpack.c.bf16 %v1845, %v1845
    %v2015 = vpack.c.bf16 %v1851, %v1851
    %v2016 = vpack.c.bf16 %v1857, %v1857
    %v2017 = vpack.c.bf16 %v1863, %v1863
    %v2018 = vpack.c.bf16 %v1869, %v1869
    %v2019 = vpack.c.bf16 %v1875, %v1875
    %v2020 = vpack.c.bf16 %v1881, %v1881
    %v2021 = vpack.c.bf16 %v1887, %v1887
    %v2022 = vpack.c.bf16 %v1893, %v1893
    %v2023 = vpack.c.bf16 %v1899, %v1899
    %v2024 = vpack.c.bf16 %v1905, %v1905
    %v2025 = vpack.c.bf16 %v1911, %v1911
    %v2026 = vpack.c.bf16 %v1917, %v1917
    %v2027 = vpack.c.bf16 %v1923, %v1923
    %v2028 = vpack.c.bf16 %v1929, %v1929
    %v2029 = vpack.c.bf16 %v1935, %v1935
    %v2030 = vpack.c.bf16 %v1941, %v1941
    %v2031 = vpack.c.bf16 %v1947, %v1947
    %v2032 = vpack.c.bf16 %v1953, %v1953
    %v2033 = vpack.c.bf16 %v1959, %v1959
    %v2034 = vpack.c.bf16 %v1965, %v1965
    %v2035 = vpack.c.bf16 %v1971, %v1971
    %v2100 = vunpack.c.l.b16 %v1972
    %v2101 = vunpack.c.l.b16 %v1973
    %v2102 = vunpack.c.l.b16 %v1974
    %v2103 = vunpack.c.l.b16 %v1975
    %v2104 = vunpack.c.l.b16 %v1976
    %v2105 = vunpack.c.l.b16 %v1977
    %v2106 = vunpack.c.l.b16 %v1978
    %v2107 = vunpack.c.l.b16 %v1979
    %v2108 = vunpack.c.l.b16 %v1980
    %v2109 = vunpack.c.l.b16 %v1981
    %v2110 = vunpack.c.l.b16 %v1982
    %v2111 = vunpack.c.l.b16 %v1983
    %v2112 = vunpack.c.l.b16 %v1984
    %v2113 = vunpack.c.l.b16 %v1985
    %v2114 = vunpack.c.l.b16 %v1986
    %v2115 = vunpack.c.l.b16 %v1987
    %v2116 = vunpack.c.l.b16 %v1988
    %v2117 = vunpack.c.l.b16 %v1989
    %v2118 = vunpack.c.l.b16 %v1990
    %v2119 = vunpack.c.l.b16 %v1991
    %v2120 = vunpack.c.l.b16 %v1992
    %v2121 = vunpack.c.l.b16 %v1993
    %v2122 = vunpack.c.l.b16 %v1994
    %v2123 = vunpack.c.l.b16 %v1995
    %v2124 = vunpack.c.l.b16 %v1996
    %v2125 = vunpack.c.l.b16 %v1997
    %v2126 = vunpack.c.l.b16 %v1998
    %v2127 = vunpack.c.l.b16 %v1999
    %v2128 = vunpack.c.l.b16 %v2000
    %v2129 = vunpack.c.l.b16 %v2001
    %v2130 = vunpack.c.l.b16 %v2002
    %v2131 = vunpack.c.l.b16 %v2003
    %v2132 = vunpack.c.l.b16 %v2004
    %v2133 = vunpack.c.l.b16 %v2005
    %v2134 = vunpack.c.l.b16 %v2006
    %v2135 = vunpack.c.l.b16 %v2007
    %v2136 = vunpack.c.l.b16 %v2008
    %v2137 = vunpack.c.l.b16 %v2009
    %v2138 = vunpack.c.l.b16 %v2010
    %v2139 = vunpack.c.l.b16 %v2011
    %v2140 = vunpack.c.l.b16 %v2012
    %v2141 = vunpack.c.l.b16 %v2013
    %v2142 = vunpack.c.l.b16 %v2014
    %v2143 = vunpack.c.l.b16 %v2015
    %v2144 = vunpack.c.l.b16 %v2016
    %v2145 = vunpack.c.l.b16 %v2017
    %v2146 = vunpack.c.l.b16 %v2018
    %v2147 = vunpack.c.l.b16 %v2019
    %v2148 = vunpack.c.l.b16 %v2020
    %v2149 = vunpack.c.l.b16 %v2021
    %v2150 = vunpack.c.l.b16 %v2022
    %v2151 = vunpack.c.l.b16 %v2023
    %v2152 = vunpack.c.l.b16 %v2024
    %v2153 = vunpack.c.l.b16 %v2025
    %v2154 = vunpack.c.l.b16 %v2026
    %v2155 = vunpack.c.l.b16 %v2027
    %v2156 = vunpack.c.l.b16 %v2028
    %v2157 = vunpack.c.l.b16 %v2029
    %v2158 = vunpack.c.l.b16 %v2030
    %v2159 = vunpack.c.l.b16 %v2031
    %v2160 = vunpack.c.l.b16 %v2032
    %v2161 = vunpack.c.l.b16 %v2033
    %v2162 = vunpack.c.l.b16 %v2034
    %v2163 = vunpack.c.l.b16 %v2035
    %v2164 = vpack.c.b16 %v2100, %v2100
    %v2165 = vpack.c.b16 %v2101, %v2101
    %v2166 = vpack.c.b16 %v2102, %v2102
    %v2167 = vpack.c.b16 %v2103, %v2103
    %v2168 = vpack.c.b16 %v2104, %v2104
    %v2169 = vpack.c.b16 %v2105, %v2105
    %v2170 = vpack.c.b16 %v2106, %v2106
    %v2171 = vpack.c.b16 %v2107, %v2107
    %v2172 = vpack.c.b16 %v2108, %v2108
    %v2173 = vpack.c.b16 %v2109, %v2109
    %v2174 = vpack.c.b16 %v2110, %v2110
    %v2175 = vpack.c.b16 %v2111, %v2111
    %v2176 = vpack.c.b16 %v2112, %v2112
    %v2177 = vpack.c.b16 %v2113, %v2113
    %v2178 = vpack.c.b16 %v2114, %v2114
    %v2179 = vpack.c.b16 %v2115, %v2115
    %v2180 = vpack.c.b16 %v2116, %v2116
    %v2181 = vpack.c.b16 %v2117, %v2117
    %v2182 = vpack.c.b16 %v2118, %v2118
    %v2183 = vpack.c.b16 %v2119, %v2119
    %v2184 = vpack.c.b16 %v2120, %v2120
    %v2185 = vpack.c.b16 %v2121, %v2121
    %v2186 = vpack.c.b16 %v2122, %v2122
    %v2187 = vpack.c.b16 %v2123, %v2123
    %v2188 = vpack.c.b16 %v2124, %v2124
    %v2189 = vpack.c.b16 %v2125, %v2125
    %v2190 = vpack.c.b16 %v2126, %v2126
    %v2191 = vpack.c.b16 %v2127, %v2127
    %v2192 = vpack.c.b16 %v2128, %v2128
    %v2193 = vpack.c.b16 %v2129, %v2129
    %v2194 = vpack.c.b16 %v2130, %v2130
    %v2195 = vpack.c.b16 %v2131, %v2131
    %v2196 = vpack.c.b16 %v2132, %v2132
    %v2197 = vpack.c.b16 %v2133, %v2133
    %v2198 = vpack.c.b16 %v2134, %v2134
    %v2199 = vpack.c.b16 %v2135, %v2135
    %v2200 = vpack.c.b16 %v2136, %v2136
    %v2201 = vpack.c.b16 %v2137, %v2137
    %v2202 = vpack.c.b16 %v2138, %v2138
    %v2203 = vpack.c.b16 %v2139, %v2139
    %v2204 = vpack.c.b16 %v2140, %v2140
    %v2205 = vpack.c.b16 %v2141, %v2141
    %v2206 = vpack.c.b16 %v2142, %v2142
    %v2207 = vpack.c.b16 %v2143, %v2143
    %v2208 = vpack.c.b16 %v2144, %v2144
    %v2209 = vpack.c.b16 %v2145, %v2145
    %v2210 = vpack.c.b16 %v2146, %v2146
    %v2211 = vpack.c.b16 %v2147, %v2147
    %v2212 = vpack.c.b16 %v2148, %v2148
    %v2213 = vpack.c.b16 %v2149, %v2149
    %v2214 = vpack.c.b16 %v2150, %v2150
    %v2215 = vpack.c.b16 %v2151, %v2151
    %v2216 = vpack.c.b16 %v2152, %v2152
    %v2217 = vpack.c.b16 %v2153, %v2153
    %v2218 = vpack.c.b16 %v2154, %v2154
    %v2219 = vpack.c.b16 %v2155, %v2155
    %v2220 = vpack.c.b16 %v2156, %v2156
    %v2221 = vpack.c.b16 %v2157, %v2157
    %v2222 = vpack.c.b16 %v2158, %v2158
    %v2223 = vpack.c.b16 %v2159, %v2159
    %v2224 = vpack.c.b16 %v2160, %v2160
    %v2225 = vpack.c.b16 %v2161, %v2161
    %v2226 = vpack.c.b16 %v2162, %v2162
    %v2227 = vpack.c.b16 %v2163, %v2163
    %v2228 = vunpack.c.l.b16 %v2164
    %v2229 = vunpack.c.l.b16 %v2165
    %v2230 = vunpack.c.l.b16 %v2166
    %v2231 = vunpack.c.l.b16 %v2167
    %v2232 = vunpack.c.l.b16 %v2168
    %v2233 = vunpack.c.l.b16 %v2169
    %v2234 = vunpack.c.l.b16 %v2170
    %v2235 = vunpack.c.l.b16 %v2171
    %v2236 = vunpack.c.l.b16 %v2172
    %v2237 = vunpack.c.l.b16 %v2173
    %v2238 = vunpack.c.l.b16 %v2174
    %v2239 = vunpack.c.l.b16 %v2175
    %v2240 = vunpack.c.l.b16 %v2176
    %v2241 = vunpack.c.l.b16 %v2177
    %v2242 = vunpack.c.l.b16 %v2178
    %v2243 = vunpack.c.l.b16 %v2179
    %v2244 = vunpack.c.l.b16 %v2180
    %v2245 = vunpack.c.l.b16 %v2181
    %v2246 = vunpack.c.l.b16 %v2182
    %v2247 = vunpack.c.l.b16 %v2183
    %v2248 = vunpack.c.l.b16 %v2184
    %v2249 = vunpack.c.l.b16 %v2185
    %v2250 = vunpack.c.l.b16 %v2186
    %v2251 = vunpack.c.l.b16 %v2187
    %v2252 = vunpack.c.l.b16 %v2188
    %v2253 = vunpack.c.l.b16 %v2189
    %v2254 = vunpack.c.l.b16 %v2190
    %v2255 = vunpack.c.l.b16 %v2191
    %v2256 = vunpack.c.l.b16 %v2192
    %v2257 = vunpack.c.l.b16 %v2193
    %v2258 = vunpack.c.l.b16 %v2194
    %v2259 = vunpack.c.l.b16 %v2195
    %v2260 = vunpack.c.l.b16 %v2196
    %v2261 = vunpack.c.l.b16 %v2197
    %v2262 = vunpack.c.l.b16 %v2198
    %v2263 = vunpack.c.l.b16 %v2199
    %v2264 = vunpack.c.l.b16 %v2200
    %v2265 = vunpack.c.l.b16 %v2201
    %v2266 = vunpack.c.l.b16 %v2202
    %v2267 = vunpack.c.l.b16 %v2203
    %v2268 = vunpack.c.l.b16 %v2204
    %v2269 = vunpack.c.l.b16 %v2205
    %v2270 = vunpack.c.l.b16 %v2206
    %v2271 = vunpack.c.l.b16 %v2207
    %v2272 = vunpack.c.l.b16 %v2208
    %v2273 = vunpack.c.l.b16 %v2209
    %v2274 = vunpack.c.l.b16 %v2210
    %v2275 = vunpack.c.l.b16 %v2211
    %v2276 = vunpack.c.l.b16 %v2212
    %v2277 = vunpack.c.l.b16 %v2213
    %v2278 = vunpack.c.l.b16 %v2214
    %v2279 = vunpack.c.l.b16 %v2215
    %v2280 = vunpack.c.l.b16 %v2216
    %v2281 = vunpack.c.l.b16 %v2217
    %v2282 = vunpack.c.l.b16 %v2218
    %v2283 = vunpack.c.l.b16 %v2219
    %v2284 = vunpack.c.l.b16 %v2220
    %v2285 = vunpack.c.l.b16 %v2221
    %v2286 = vunpack.c.l.b16 %v2222
    %v2287 = vunpack.c.l.b16 %v2223
    %v2288 = vunpack.c.l.b16 %v2224
    %v2289 = vunpack.c.l.b16 %v2225
    %v2290 = vunpack.c.l.b16 %v2226
    %v2291 = vunpack.c.l.b16 %v2227
    %vm2292 = vcmask 1041409
    %v2293 = vsel %vm2292, %v2229, %v2228
    %vm2294 = vcmask 1042434
    %v2295 = vsel %vm2294, %v2230, %v2293
    %vm2296 = vcmask 1043459
    %v2297 = vsel %vm2296, %v2231, %v2295
    %vm2298 = vcmask 1044484
    %v2299 = vsel %vm2298, %v2232, %v2297
    %vm2300 = vcmask 1045509
    %v2301 = vsel %vm2300, %v2233, %v2299
    %vm2302 = vcmask 1046534
    %v2303 = vsel %vm2302, %v2234, %v2301
    %vm2304 = vcmask 1047559
    %v2305 = vsel %vm2304, %v2235, %v2303
    %v2306 = vsel %vm2292, %v2237, %v2236
    %v2307 = vsel %vm2294, %v2238, %v2306
    %v2308 = vsel %vm2296, %v2239, %v2307
    %v2309 = vsel %vm2298, %v2240, %v2308
    %v2310 = vsel %vm2300, %v2241, %v2309
    %v2311 = vsel %vm2302, %v2242, %v2310
    %v2312 = vsel %vm2304, %v2243, %v2311
    %v2313 = vsel %vm2292, %v2245, %v2244
    %v2314 = vsel %vm2294, %v2246, %v2313
    %v2315 = vsel %vm2296, %v2247, %v2314
    %v2316 = vsel %vm2298, %v2248, %v2315
    %v2317 = vsel %vm2300, %v2249, %v2316
    %v2318 = vsel %vm2302, %v2250, %v2317
    %v2319 = vsel %vm2304, %v2251, %v2318
    %v2320 = vsel %vm2292, %v2253, %v2252
    %v2321 = vsel %vm2294, %v2254, %v2320
    %v2322 = vsel %vm2296, %v2255, %v2321
    %v2323 = vsel %vm2298, %v2256, %v2322
    %v2324 = vsel %vm2300, %v2257, %v2323
    %v2325 = vsel %vm2302, %v2258, %v2324
    %v2326 = vsel %vm2304, %v2259, %v2325
    %v2327 = vsel %vm2292, %v2261, %v2260
    %v2328 = vsel %vm2294, %v2262, %v2327
    %v2329 = vsel %vm2296, %v2263, %v2328
    %v2330 = vsel %vm2298, %v2264, %v2329
    %v2331 = vsel %vm2300, %v2265, %v2330
    %v2332 = vsel %vm2302, %v2266, %v2331
    %v2333 = vsel %vm2304, %v2267, %v2332
    %v2334 = vsel %vm2292, %v2269, %v2268
    %v2335 = vsel %vm2294, %v2270, %v2334
    %v2336 = vsel %vm2296, %v2271, %v2335
    %v2337 = vsel %vm2298, %v2272, %v2336
    %v2338 = vsel %vm2300, %v2273, %v2337
    %v2339 = vsel %vm2302, %v2274, %v2338
    %v2340 = vsel %vm2304, %v2275, %v2339
    %v2341 = vsel %vm2292, %v2277, %v2276
    %v2342 = vsel %vm2294, %v2278, %v2341
    %v2343 = vsel %vm2296, %v2279, %v2342
    %v2344 = vsel %vm2298, %v2280, %v2343
    %v2345 = vsel %vm2300, %v2281, %v2344
    %v2346 = vsel %vm2302, %v2282, %v2345
    %v2347 = vsel %vm2304, %v2283, %v2346
    %v2348 = vsel %vm2292, %v2285, %v2284
    %v2349 = vsel %vm2294, %v2286, %v2348
    %v2350 = vsel %vm2296, %v2287, %v2349
    %v2351 = vsel %vm2298, %v2288, %v2350
    %v2352 = vsel %vm2300, %v2289, %v2351
    %v2353 = vsel %vm2302, %v2290, %v2352
    %v2354 = vsel %vm2304, %v2291, %v2353
    %v2355 = vpack.c.b16 %v2305, %v2305
    %v2356 = vpack.c.b16 %v2312, %v2312
    %v2357 = vpack.c.b16 %v2319, %v2319
    %v2358 = vpack.c.b16 %v2326, %v2326
    %v2359 = vpack.c.b16 %v2333, %v2333
    %v2360 = vpack.c.b16 %v2340, %v2340
    %v2361 = vpack.c.b16 %v2347, %v2347
    %v2362 = vpack.c.b16 %v2354, %v2354
    %2371 = vst [vmem:[#allocation2] sm:$0xf] %v2355
    %2372 = vst [vmem:[#allocation2 + $0x4] sm:$0xf] %v2356
    %2373 = vst [vmem:[#allocation2 + $0x8] sm:$0xf] %v2357
    %2374 = vst [vmem:[#allocation2 + $0xc] sm:$0xf] %v2358
    %2375 = vst [vmem:[#allocation2 + $0x10] sm:$0xf] %v2359
    %2376 = vst [vmem:[#allocation2 + $0x14] sm:$0xf] %v2360
    %2377 = vst [vmem:[#allocation2 + $0x18] sm:$0xf] %v2361
    %2378 = vst [vmem:[#allocation2 + $0x1c] sm:$0xf] %v2362
    // Predicated region
    $region22: #{tpu_custom_call.1} parent=1 // pred_check
      _
    $region23: #{tpu_custom_call.1} parent=1 // pred_check_branch
      %2380 = sbr.rel (0) target = $region25
    $region24: #{tpu_custom_call.1} parent=1 // pred_region
      %s2382 = ssub.s32 512, 512
      %2383 = vsyncadd [#allocation3], %s2382
      %s2384 = sshll.u32 [#allocation2], 4
      %s2385 = int_to_ptr.vmem [resolvable:$true] %s2384
      %2390 = dma.vmem_to_hbm [thread:$0]  %s2385, 512, %s5, [#allocation3], 64, 64, 4
    $region25: #{tpu_custom_call.1} parent=1 // pred_fallthru
      _
    // Predicated region
    $region26: #{tpu_custom_call.1} parent=1 // pred_check
      _
    $region27: #{tpu_custom_call.1} parent=1 // pred_check_branch
      %2392 = sbr.rel (0) target = $region29
    $region28: #{tpu_custom_call.1} parent=1 // pred_region
      %2393 = dma.done [#allocation3], 512
    $region29: #{tpu_custom_call.1} parent=1 // pred_fallthru
      _
    %2394 = vsyncpa [#allocation3], 1

</llo_original>
